<compile_context>
chip_gen: v7x
topology: tpu7x:2x2x1
jax: 0.10.0
libtpu: 0.0.40
codegen_flags: <defaults>
</compile_context>

<pallas_src>
import functools
import math

import jax
import jax.numpy as jnp
from jax.experimental import pallas as pl
from jax.experimental.pallas import tpu as pltpu

_LANE = 128
# Node tile for adj streaming. 256 is a good default for v6e/v7x; on v5e
# (4x128^2 MXU, single vst slot) 128 keeps vreg/VMEM pressure lower.
_NODE_TILE = 256
_NEG = float(jnp.finfo(jnp.float32).min)


def _round_up(x, m):
    return (x + m - 1) // m * m


def _pad2(a, rows, cols):
    return jnp.pad(a, ((0, rows - a.shape[0]), (0, cols - a.shape[1])))


def _vmem_limit(*byte_counts):
    # Explicit scoped-VMEM limit with headroom; 32 MiB cap is safe on all of
    # v5e/v6e (128 MiB physical) and v7x (64 MiB physical).
    est = sum(byte_counts) + (2 << 20)
    return int(min(max(2 * est, 8 << 20), 32 << 20))


# ----------------------------------------------------------------------------
# Kernel A: support = x @ W   (bf16 MXU inputs, f32 accumulation, bf16 output)
# ----------------------------------------------------------------------------
def _xw_kernel(x_ref, w_ref, out_ref):
    out_ref[...] = jnp.dot(
        x_ref[...], w_ref[...], preferred_element_type=jnp.float32
    ).astype(out_ref.dtype)


def _xw(x, w, *, tile):
    n, fin = x.shape
    fout = w.shape[1]
    cost = pl.CostEstimate(
        flops=2 * n * fin * fout,
        transcendentals=0,
        bytes_accessed=x.size * x.dtype.itemsize
        + w.size * w.dtype.itemsize
        + n * fout * 2,
    )
    vmem = _vmem_limit(
        2 * tile * fin * 2,   # x tile (double-buffered, bf16)
        2 * fin * fout * 2,   # resident weight
        2 * tile * fout * 2,  # out tile
    )
    return pl.pallas_call(
        _xw_kernel,
        out_shape=jax.ShapeDtypeStruct((n, fout), jnp.bfloat16),
        grid=(n // tile,),
        in_specs=[
            pl.BlockSpec((tile, fin), lambda i: (i, 0)),
            pl.BlockSpec((fin, fout), lambda i: (0, 0)),  # weight stays resident
        ],
        out_specs=pl.BlockSpec((tile, fout), lambda i: (i, 0)),
        compiler_params=pltpu.CompilerParams(
            dimension_semantics=("parallel",),
            vmem_limit_bytes=vmem,
        ),
        cost_estimate=cost,
    )(x, w)


# ----------------------------------------------------------------------------
# Kernel B: out = act(adj @ support + bias)
#   adj tiles streamed over a (row, reduction) grid, support slab resident,
#   f32 accumulator scratch, pl.when init/finalize.
# ----------------------------------------------------------------------------
def _aggregate_kernel(adj_ref, s_ref, b_ref, out_ref, acc_ref, *, tile, nvalid, act):
    k = pl.program_id(1)

    @pl.when(k == 0)
    def _init():
        acc_ref[...] = jnp.zeros_like(acc_ref)

    koff = pl.multiple_of(k * tile, tile)
    s_blk = s_ref[pl.ds(koff, tile), :]
    acc_ref[...] += jnp.dot(adj_ref[...], s_blk, preferred_element_type=jnp.float32)

    @pl.when(k == pl.num_programs(1) - 1)
    def _finalize():
        z = acc_ref[...] + b_ref[...]
        if act == "relu":
            out_ref[...] = jnp.maximum(z, 0.0).astype(out_ref.dtype)
        else:  # masked log_softmax over the first `nvalid` (real) classes
            col = jax.lax.broadcasted_iota(jnp.int32, z.shape, 1)
            valid = col < nvalid
            zm = jnp.where(valid, z, _NEG)
            m = jnp.max(zm, axis=-1, keepdims=True)
            e = jnp.where(valid, jnp.exp(zm - m), 0.0)
            lse = jnp.log(jnp.sum(e, axis=-1, keepdims=True))
            out_ref[...] = (zm - m - lse).astype(out_ref.dtype)


def _aggregate(adj, s, b, *, tile, act, nvalid, out_dtype):
    n = adj.shape[0]
    fout = s.shape[1]
    kernel = functools.partial(_aggregate_kernel, tile=tile, nvalid=nvalid, act=act)
    out_isize = jnp.dtype(out_dtype).itemsize
    cost = pl.CostEstimate(
        flops=2 * n * n * fout,
        transcendentals=(n * fout if act == "log_softmax" else 0),
        bytes_accessed=adj.size * adj.dtype.itemsize
        + s.size * s.dtype.itemsize
        + b.size * b.dtype.itemsize
        + n * fout * out_isize,
    )
    vmem = _vmem_limit(
        2 * tile * tile * 2,        # streamed adj tile (double-buffered, bf16)
        2 * n * fout * 2,           # resident support slab (bf16)
        2 * fout * 4,               # bias
        2 * tile * fout * out_isize,  # output tile
        tile * fout * 4,            # f32 accumulator scratch
    )
    return pl.pallas_call(
        kernel,
        out_shape=jax.ShapeDtypeStruct((n, fout), out_dtype),
        grid=(n // tile, n // tile),
        in_specs=[
            pl.BlockSpec((tile, tile), lambda i, k: (i, k)),  # stream adj
            pl.BlockSpec((n, fout), lambda i, k: (0, 0)),     # resident support
            pl.BlockSpec((1, fout), lambda i, k: (0, 0)),     # resident bias
        ],
        out_specs=pl.BlockSpec((tile, fout), lambda i, k: (i, 0)),
        scratch_shapes=[pltpu.VMEM((tile, fout), jnp.float32)],
        compiler_params=pltpu.CompilerParams(
            dimension_semantics=("parallel", "arbitrary"),
            vmem_limit_bytes=vmem,
        ),
        cost_estimate=cost,
    )(adj, s, b)


# ----------------------------------------------------------------------------
# Full GCN forward
# ----------------------------------------------------------------------------
def gcn_forward(x, adj, w1, b1, w2, b2):
    n, nfeat = x.shape
    nhid = w1.shape[1]
    nclass = w2.shape[1]

    tile = min(_NODE_TILE, _round_up(n, _LANE))
    n_p = _round_up(n, tile)
    f_p = _round_up(nfeat, _LANE)
    h_p = _round_up(nhid, _LANE)
    c_p = _round_up(nclass, _LANE)

    bf = jnp.bfloat16
    x_p = _pad2(x, n_p, f_p).astype(bf)
    adj_p = _pad2(adj, n_p, n_p).astype(bf)
    w1_p = _pad2(w1, f_p, h_p).astype(bf)
    w2_p = _pad2(w2, h_p, c_p).astype(bf)
    b1_p = _pad2(b1.reshape(1, -1), 1, h_p).astype(jnp.float32)
    b2_p = _pad2(b2.reshape(1, -1), 1, c_p).astype(jnp.float32)

    # --- layer 1: h = relu(adj @ (x @ W1) + b1) ---
    s1 = _xw(x_p, w1_p, tile=tile)
    h = _aggregate(adj_p, s1, b1_p, tile=tile, act="relu",
                   nvalid=nhid, out_dtype=jnp.bfloat16)
    # TODO(synk): F.dropout with training=True would need pltpu.prng_* masking;
    # inference semantics (dropout = identity) are implemented here.

    # --- layer 2: log_softmax(adj @ (h @ W2) + b2, dim=1) ---
    s2 = _xw(h, w2_p, tile=tile)
    out = _aggregate(adj_p, s2, b2_p, tile=tile, act="log_softmax",
                     nvalid=nclass, out_dtype=jnp.float32)
    return out[:n, :nclass]


def init_gc_params(key, in_features, out_features):
    """Mirror GraphConvolution.reset_parameters: U(-stdv, stdv), stdv=1/sqrt(out)."""
    stdv = 1.0 / math.sqrt(out_features)
    kw, kb = jax.random.split(key)
    w = jax.random.uniform(kw, (in_features, out_features), jnp.float32,
                           minval=-stdv, maxval=stdv)
    b = jax.random.uniform(kb, (out_features,), jnp.float32,
                           minval=-stdv, maxval=stdv)
    return w, b


if __name__ == "__main__":
    # Small shapes consistent with GCN(nfeat, nhid, nclass, dropout)
    N, NFEAT, NHID, NCLASS = 16, 32, 16, 8

    key = jax.random.PRNGKey(0)
    kx, kadj, k1, k2 = jax.random.split(key, 4)

    x = jax.random.normal(kx, (N, NFEAT), jnp.float32)

    # symmetric, row-normalized adjacency with self-loops (typical GCN input)
    a = (jax.random.uniform(kadj, (N, N)) > 0.7).astype(jnp.float32)
    a = jnp.maximum(a, a.T) + jnp.eye(N, dtype=jnp.float32)
    adj = a / jnp.sum(a, axis=1, keepdims=True)

    w1, b1 = init_gc_params(k1, NFEAT, NHID)
    w2, b2 = init_gc_params(k2, NHID, NCLASS)

    fwd = jax.jit(gcn_forward)
    out = fwd(x, adj, w1, b1, w2, b2)
    jax.block_until_ready(out)

    # --- reference with the same bf16 MXU-input quantization (tight check) ---
    bf = jnp.bfloat16
    xb, ab = x.astype(bf), adj.astype(bf)
    s1_ref = jnp.dot(xb, w1.astype(bf), preferred_element_type=jnp.float32).astype(bf)
    h_ref = jnp.maximum(
        jnp.dot(ab, s1_ref, preferred_element_type=jnp.float32) + b1, 0.0
    ).astype(bf)
    s2_ref = jnp.dot(h_ref, w2.astype(bf), preferred_element_type=jnp.float32).astype(bf)
    logits_ref = jnp.dot(ab, s2_ref, preferred_element_type=jnp.float32) + b2
    ref_bf16 = jax.nn.log_softmax(logits_ref, axis=1)
    assert jnp.allclose(out, ref_bf16, atol=1e-4, rtol=1e-4), "mismatch vs bf16 reference"

    # --- pure-f32 PyTorch-equivalent reference (loose check: bf16 rounding) ---
    h32 = jnp.maximum(adj @ (x @ w1) + b1, 0.0)
    ref_f32 = jax.nn.log_softmax(adj @ (h32 @ w2) + b2, axis=1)
    assert jnp.allclose(out, ref_f32, atol=1e-1, rtol=1e-1), "mismatch vs f32 reference"

    print("KERNEL_OK")
</pallas_src>

<mosaic_0001>
module attributes {stable_mosaic.version = 11 : i64} {
  func.func @_aggregate_kernel(%arg0: i32, %arg1: i32, %arg2: memref<128x128xbf16, #tpu.memory_space<vmem>>, %arg3: memref<128x128xbf16, #tpu.memory_space<vmem>>, %arg4: memref<1x128xf32, #tpu.memory_space<vmem>>, %arg5: memref<128x128xbf16, #tpu.memory_space<vmem>>, %arg6: memref<128x128xf32, #tpu.memory_space<vmem>>) attributes {dimension_semantics = [#tpu.dimension_semantics<parallel>, #tpu.dimension_semantics<arbitrary>], iteration_bounds = array<i64: 1, 1>, scalar_prefetch = 0 : i64, scratch_operands = 1 : i64, tpu.core_type = #tpu.core_type<tc>, window_params = [{transform_indices = @transform_0, window_bounds = array<i64: 128, 128>}, {pipeline_mode = #tpu.pipeline_mode<synchronous>, transform_indices = @transform_1, window_bounds = array<i64: 128, 128>}, {pipeline_mode = #tpu.pipeline_mode<synchronous>, transform_indices = @transform_2, window_bounds = array<i64: 1, 128>}, {transform_indices = @transform_3, window_bounds = array<i64: 128, 128>}]} {
    %c0_i32 = arith.constant 0 : i32
    %0 = arith.cmpi eq, %arg1, %c0_i32 : i32
    %1 = arith.extui %0 : i1 to i32
    %c0_i32_0 = arith.constant 0 : i32
    %2 = arith.cmpi ne, %1, %c0_i32_0 : i32
    scf.if %2 {
      %cst_9 = arith.constant 0.000000e+00 : f32
      %15 = vector.broadcast %cst_9 : f32 to vector<128x128xf32>
      %c0_10 = arith.constant 0 : index
      %c0_11 = arith.constant 0 : index
      %16 = vector.load %arg6[%c0_10, %c0_11] : memref<128x128xf32, #tpu.memory_space<vmem>>, vector<128x128xf32>
      tpu.vector_store %arg6[%c0_10, %c0_11], %15 {strides = array<i32>} : memref<128x128xf32, #tpu.memory_space<vmem>>, vector<128x128xf32>,
    } else {
    }
    %c128_i32 = arith.constant 128 : i32
    %3 = arith.muli %arg1, %c128_i32 : i32
    %4 = tpu.assume_multiple %3, 128 : i32
    %5 = arith.index_cast %4 : i32 to index
    %c0 = arith.constant 0 : index
    %6 = vector.load %arg3[%5, %c0] : memref<128x128xbf16, #tpu.memory_space<vmem>>, vector<128x128xbf16>
    %c0_1 = arith.constant 0 : index
    %c0_2 = arith.constant 0 : index
    %7 = vector.load %arg6[%c0_1, %c0_2] : memref<128x128xf32, #tpu.memory_space<vmem>>, vector<128x128xf32>
    %c0_3 = arith.constant 0 : index
    %c0_4 = arith.constant 0 : index
    %8 = vector.load %arg2[%c0_3, %c0_4] : memref<128x128xbf16, #tpu.memory_space<vmem>>, vector<128x128xbf16>
    %cst = arith.constant dense<0.000000e+00> : vector<128x128xf32>
    %9 = tpu.matmul %8, %6, %cst {dimension_numbers = #tpu.dot_dimension_numbers<[1], [0], [0], [1], [0, 0, 1, 1], [], []>} : vector<128x128xbf16>, vector<128x128xbf16>, vector<128x128xf32> -> vector<128x128xf32>
    %10 = arith.addf %7, %9 : vector<128x128xf32>
    %c0_5 = arith.constant 0 : index
    %c0_6 = arith.constant 0 : index
    %11 = vector.load %arg6[%c0_5, %c0_6] : memref<128x128xf32, #tpu.memory_space<vmem>>, vector<128x128xf32>
    tpu.vector_store %arg6[%c0_5, %c0_6], %10 {strides = array<i32>} : memref<128x128xf32, #tpu.memory_space<vmem>>, vector<128x128xf32>,
    %c0_i32_7 = arith.constant 0 : i32
    %12 = arith.cmpi eq, %arg1, %c0_i32_7 : i32
    %13 = arith.extui %12 : i1 to i32
    %c0_i32_8 = arith.constant 0 : i32
    %14 = arith.cmpi ne, %13, %c0_i32_8 : i32
    scf.if %14 {
      %c0_9 = arith.constant 0 : index
      %c0_10 = arith.constant 0 : index
      %15 = vector.load %arg6[%c0_9, %c0_10] : memref<128x128xf32, #tpu.memory_space<vmem>>, vector<128x128xf32>
      %c0_11 = arith.constant 0 : index
      %c0_12 = arith.constant 0 : index
      %16 = vector.load %arg4[%c0_11, %c0_12] : memref<1x128xf32, #tpu.memory_space<vmem>>, vector<1x128xf32>
      %17 = vector.broadcast %16 : vector<1x128xf32> to vector<128x128xf32>
      %18 = arith.addf %15, %17 : vector<128x128xf32>
      %cst_13 = arith.constant 0.000000e+00 : f32
      %19 = vector.broadcast %cst_13 : f32 to vector<128x128xf32>
      %20 = arith.maximumf %18, %19 : vector<128x128xf32>
      %21 = arith.truncf %20 : vector<128x128xf32> to vector<128x128xbf16>
      %c0_14 = arith.constant 0 : index
      %c0_15 = arith.constant 0 : index
      %22 = vector.load %arg5[%c0_14, %c0_15] : memref<128x128xbf16, #tpu.memory_space<vmem>>, vector<128x128xbf16>
      tpu.vector_store %arg5[%c0_14, %c0_15], %21 {strides = array<i32>} : memref<128x128xbf16, #tpu.memory_space<vmem>>, vector<128x128xbf16>,
    } else {
    }
    return
  }
  func.func @transform_0(%arg0: i32, %arg1: i32) -> (i32, i32) {
    %c0_i32 = arith.constant 0 : i32
    return %arg0, %arg1 : i32, i32
  }
  func.func @transform_1(%arg0: i32, %arg1: i32) -> (i32, i32) {
    %c0_i32 = arith.constant 0 : i32
    %c0_i32_0 = arith.constant 0 : i32
    %c0_i32_1 = arith.constant 0 : i32
    return %c0_i32, %c0_i32_0 : i32, i32
  }
  func.func @transform_2(%arg0: i32, %arg1: i32) -> (i32, i32) {
    %c0_i32 = arith.constant 0 : i32
    %c0_i32_0 = arith.constant 0 : i32
    %c0_i32_1 = arith.constant 0 : i32
    return %c0_i32, %c0_i32_0 : i32, i32
  }
  func.func @transform_3(%arg0: i32, %arg1: i32) -> (i32, i32) {
    %c0_i32 = arith.constant 0 : i32
    %c0_i32_0 = arith.constant 0 : i32
    return %arg0, %c0_i32 : i32, i32
  }
}

module attributes {stable_mosaic.version = 11 : i64} {
  func.func @_xw_kernel(%arg0: i32, %arg1: memref<128x128xbf16, #tpu.memory_space<vmem>>, %arg2: memref<128x128xbf16, #tpu.memory_space<vmem>>, %arg3: memref<128x128xbf16, #tpu.memory_space<vmem>>) attributes {dimension_semantics = [#tpu.dimension_semantics<parallel>], iteration_bounds = array<i64: 1>, scalar_prefetch = 0 : i64, scratch_operands = 0 : i64, tpu.core_type = #tpu.core_type<tc>, window_params = [{transform_indices = @transform_0, window_bounds = array<i64: 128, 128>}, {pipeline_mode = #tpu.pipeline_mode<synchronous>, transform_indices = @transform_1, window_bounds = array<i64: 128, 128>}, {transform_indices = @transform_2, window_bounds = array<i64: 128, 128>}]} {
    %c0 = arith.constant 0 : index
    %c0_0 = arith.constant 0 : index
    %0 = vector.load %arg1[%c0, %c0_0] : memref<128x128xbf16, #tpu.memory_space<vmem>>, vector<128x128xbf16>
    %c0_1 = arith.constant 0 : index
    %c0_2 = arith.constant 0 : index
    %1 = vector.load %arg2[%c0_1, %c0_2] : memref<128x128xbf16, #tpu.memory_space<vmem>>, vector<128x128xbf16>
    %cst = arith.constant dense<0.000000e+00> : vector<128x128xf32>
    %2 = tpu.matmul %0, %1, %cst {dimension_numbers = #tpu.dot_dimension_numbers<[1], [0], [0], [1], [0, 0, 1, 1], [], []>} : vector<128x128xbf16>, vector<128x128xbf16>, vector<128x128xf32> -> vector<128x128xf32>
    %3 = arith.truncf %2 : vector<128x128xf32> to vector<128x128xbf16>
    %c0_3 = arith.constant 0 : index
    %c0_4 = arith.constant 0 : index
    %4 = vector.load %arg3[%c0_3, %c0_4] : memref<128x128xbf16, #tpu.memory_space<vmem>>, vector<128x128xbf16>
    tpu.vector_store %arg3[%c0_3, %c0_4], %3 {strides = array<i32>} : memref<128x128xbf16, #tpu.memory_space<vmem>>, vector<128x128xbf16>,
    return
  }
  func.func @transform_0(%arg0: i32) -> (i32, i32) {
    %c0_i32 = arith.constant 0 : i32
    %c0_i32_0 = arith.constant 0 : i32
    return %arg0, %c0_i32 : i32, i32
  }
  func.func @transform_1(%arg0: i32) -> (i32, i32) {
    %c0_i32 = arith.constant 0 : i32
    %c0_i32_0 = arith.constant 0 : i32
    %c0_i32_1 = arith.constant 0 : i32
    return %c0_i32, %c0_i32_0 : i32, i32
  }
  func.func @transform_2(%arg0: i32) -> (i32, i32) {
    %c0_i32 = arith.constant 0 : i32
    %c0_i32_0 = arith.constant 0 : i32
    return %arg0, %c0_i32 : i32, i32
  }
}

module attributes {stable_mosaic.version = 11 : i64} {
  func.func @_aggregate_kernel(%arg0: i32, %arg1: i32, %arg2: memref<128x128xbf16, #tpu.memory_space<vmem>>, %arg3: memref<128x128xbf16, #tpu.memory_space<vmem>>, %arg4: memref<1x128xf32, #tpu.memory_space<vmem>>, %arg5: memref<128x128xf32, #tpu.memory_space<vmem>>, %arg6: memref<128x128xf32, #tpu.memory_space<vmem>>) attributes {dimension_semantics = [#tpu.dimension_semantics<parallel>, #tpu.dimension_semantics<arbitrary>], iteration_bounds = array<i64: 1, 1>, scalar_prefetch = 0 : i64, scratch_operands = 1 : i64, tpu.core_type = #tpu.core_type<tc>, window_params = [{transform_indices = @transform_0, window_bounds = array<i64: 128, 128>}, {pipeline_mode = #tpu.pipeline_mode<synchronous>, transform_indices = @transform_1, window_bounds = array<i64: 128, 128>}, {pipeline_mode = #tpu.pipeline_mode<synchronous>, transform_indices = @transform_2, window_bounds = array<i64: 1, 128>}, {transform_indices = @transform_3, window_bounds = array<i64: 128, 128>}]} {
    %c0_i32 = arith.constant 0 : i32
    %0 = arith.cmpi eq, %arg1, %c0_i32 : i32
    %1 = arith.extui %0 : i1 to i32
    %c0_i32_0 = arith.constant 0 : i32
    %2 = arith.cmpi ne, %1, %c0_i32_0 : i32
    scf.if %2 {
      %cst_9 = arith.constant 0.000000e+00 : f32
      %15 = vector.broadcast %cst_9 : f32 to vector<128x128xf32>
      %c0_10 = arith.constant 0 : index
      %c0_11 = arith.constant 0 : index
      %16 = vector.load %arg6[%c0_10, %c0_11] : memref<128x128xf32, #tpu.memory_space<vmem>>, vector<128x128xf32>
      tpu.vector_store %arg6[%c0_10, %c0_11], %15 {strides = array<i32>} : memref<128x128xf32, #tpu.memory_space<vmem>>, vector<128x128xf32>,
    } else {
    }
    %c128_i32 = arith.constant 128 : i32
    %3 = arith.muli %arg1, %c128_i32 : i32
    %4 = tpu.assume_multiple %3, 128 : i32
    %5 = arith.index_cast %4 : i32 to index
    %c0 = arith.constant 0 : index
    %6 = vector.load %arg3[%5, %c0] : memref<128x128xbf16, #tpu.memory_space<vmem>>, vector<128x128xbf16>
    %c0_1 = arith.constant 0 : index
    %c0_2 = arith.constant 0 : index
    %7 = vector.load %arg6[%c0_1, %c0_2] : memref<128x128xf32, #tpu.memory_space<vmem>>, vector<128x128xf32>
    %c0_3 = arith.constant 0 : index
    %c0_4 = arith.constant 0 : index
    %8 = vector.load %arg2[%c0_3, %c0_4] : memref<128x128xbf16, #tpu.memory_space<vmem>>, vector<128x128xbf16>
    %cst = arith.constant dense<0.000000e+00> : vector<128x128xf32>
    %9 = tpu.matmul %8, %6, %cst {dimension_numbers = #tpu.dot_dimension_numbers<[1], [0], [0], [1], [0, 0, 1, 1], [], []>} : vector<128x128xbf16>, vector<128x128xbf16>, vector<128x128xf32> -> vector<128x128xf32>
    %10 = arith.addf %7, %9 : vector<128x128xf32>
    %c0_5 = arith.constant 0 : index
    %c0_6 = arith.constant 0 : index
    %11 = vector.load %arg6[%c0_5, %c0_6] : memref<128x128xf32, #tpu.memory_space<vmem>>, vector<128x128xf32>
    tpu.vector_store %arg6[%c0_5, %c0_6], %10 {strides = array<i32>} : memref<128x128xf32, #tpu.memory_space<vmem>>, vector<128x128xf32>,
    %c0_i32_7 = arith.constant 0 : i32
    %12 = arith.cmpi eq, %arg1, %c0_i32_7 : i32
    %13 = arith.extui %12 : i1 to i32
    %c0_i32_8 = arith.constant 0 : i32
    %14 = arith.cmpi ne, %13, %c0_i32_8 : i32
    scf.if %14 {
      %c0_9 = arith.constant 0 : index
      %c0_10 = arith.constant 0 : index
      %15 = vector.load %arg6[%c0_9, %c0_10] : memref<128x128xf32, #tpu.memory_space<vmem>>, vector<128x128xf32>
      %c0_11 = arith.constant 0 : index
      %c0_12 = arith.constant 0 : index
      %16 = vector.load %arg4[%c0_11, %c0_12] : memref<1x128xf32, #tpu.memory_space<vmem>>, vector<1x128xf32>
      %17 = vector.broadcast %16 : vector<1x128xf32> to vector<128x128xf32>
      %18 = arith.addf %15, %17 : vector<128x128xf32>
      %19 = tpu.iota {dimensions = array<i32: 1>} : vector<128x128xi32>
      %c8_i32 = arith.constant 8 : i32
      %20 = vector.broadcast %c8_i32 : i32 to vector<128x128xi32>
      %21 = arith.cmpi slt, %19, %20 : vector<128x128xi32>
      %cst_13 = arith.constant -3.40282347E+38 : f32
      %22 = vector.broadcast %cst_13 : f32 to vector<128x128xf32>
      %23 = arith.select %21, %18, %22 : vector<128x128xi1>, vector<128x128xf32>
      %cst_14 = arith.constant dense<0xFF800000> : vector<128xf32>
      %24 = vector.multi_reduction <maximumf>, %23, %cst_14 [1] : vector<128x128xf32> to vector<128xf32>
      %25 = vector.shape_cast %24 : vector<128xf32> to vector<128x1xf32>
      %26 = vector.broadcast %25 : vector<128x1xf32> to vector<128x128xf32>
      %27 = arith.subf %23, %26 : vector<128x128xf32>
      %28 = math.exp %27 : vector<128x128xf32>
      %cst_15 = arith.constant 0.000000e+00 : f32
      %29 = vector.broadcast %cst_15 : f32 to vector<128x128xf32>
      %30 = arith.select %21, %28, %29 : vector<128x128xi1>, vector<128x128xf32>
      %cst_16 = arith.constant dense<0.000000e+00> : vector<128xf32>
      %31 = vector.multi_reduction <add>, %30, %cst_16 [1] : vector<128x128xf32> to vector<128xf32>
      %32 = vector.shape_cast %31 : vector<128xf32> to vector<128x1xf32>
      %33 = math.log %32 : vector<128x1xf32>
      %34 = vector.broadcast %25 : vector<128x1xf32> to vector<128x128xf32>
      %35 = arith.subf %23, %34 : vector<128x128xf32>
      %36 = vector.broadcast %33 : vector<128x1xf32> to vector<128x128xf32>
      %37 = arith.subf %35, %36 : vector<128x128xf32>
      %c0_17 = arith.constant 0 : index
      %c0_18 = arith.constant 0 : index
      %38 = vector.load %arg5[%c0_17, %c0_18] : memref<128x128xf32, #tpu.memory_space<vmem>>, vector<128x128xf32>
      tpu.vector_store %arg5[%c0_17, %c0_18], %37 {strides = array<i32>} : memref<128x128xf32, #tpu.memory_space<vmem>>, vector<128x128xf32>,
    } else {
    }
    return
  }
  func.func @transform_0(%arg0: i32, %arg1: i32) -> (i32, i32) {
    %c0_i32 = arith.constant 0 : i32
    return %arg0, %arg1 : i32, i32
  }
  func.func @transform_1(%arg0: i32, %arg1: i32) -> (i32, i32) {
    %c0_i32 = arith.constant 0 : i32
    %c0_i32_0 = arith.constant 0 : i32
    %c0_i32_1 = arith.constant 0 : i32
    return %c0_i32, %c0_i32_0 : i32, i32
  }
  func.func @transform_2(%arg0: i32, %arg1: i32) -> (i32, i32) {
    %c0_i32 = arith.constant 0 : i32
    %c0_i32_0 = arith.constant 0 : i32
    %c0_i32_1 = arith.constant 0 : i32
    return %c0_i32, %c0_i32_0 : i32, i32
  }
  func.func @transform_3(%arg0: i32, %arg1: i32) -> (i32, i32) {
    %c0_i32 = arith.constant 0 : i32
    %c0_i32_0 = arith.constant 0 : i32
    return %arg0, %c0_i32 : i32, i32
  }
}

</mosaic_0001>

<llo_original>
// kernel: gcn_forward.7
$region0: #{gcn_forward.7}
  #allocation0 [shape = 'u32[]', space=smem, size = 0x4, offset = 0x4, fixed_abs, tag = 'smem constant byte address 0x4 - core index']
  #allocation1 [shape = 'u32[144,128]{1,0:T(1,128)}', space=vmem, size = 0x12000, scoped, tag = 'internal scratch']
  #allocation2 [shape = 'f32[128,128]{1,0:T(8,128)}', space=vmem, size = 0x10000, scoped, tag = 'scratch operand']
  %s0 = inlined_call_operand.vmem [shape: bf16[128,128], index: 0, kind: input, shape index: {}]
  %s1 = inlined_call_operand.vmem [shape: bf16[128,128], index: 1, kind: input, shape index: {}]
  %s2 = inlined_call_operand.vmem [shape: f32[1,128], index: 2, kind: input, shape index: {}]
  %s3 = inlined_call_operand.vmem [shape: f32[128,128], index: 3, kind: output, shape index: {}]
  %s4 = sld [smem:[#allocation0]]
  $region30: #{gcn_forward.7} parent=0
    _
  %s6 = ssub.s32 1, %s4
  %s7 = scalar_select 0, %s6, %s4
  // Predicated region
  $region2: #{gcn_forward.7} parent=0 // pred_check
    _
  $region3: #{gcn_forward.7} parent=0 // pred_check_branch
    %9 = sbr.rel (0) target = $region5
  $region4: #{gcn_forward.7} parent=0 // pred_region
    _
  $region5: #{gcn_forward.7} parent=0 // pred_fallthru
    _
  // Predicated region
  $region6: #{gcn_forward.7} parent=0 // pred_check
    _
  $region7: #{gcn_forward.7} parent=0 // pred_check_branch
    %11 = sbr.rel (0) target = $region9
  $region8: #{gcn_forward.7} parent=0 // pred_region
    _
  $region9: #{gcn_forward.7} parent=0 // pred_fallthru
    _
  // Predicated region
  $region10: #{gcn_forward.7} parent=0 // pred_check
    _
  $region11: #{gcn_forward.7} parent=0 // pred_check_branch
    %13 = sbr.rel (0) target = $region13
  $region12: #{gcn_forward.7} parent=0 // pred_region
    _
  $region13: #{gcn_forward.7} parent=0 // pred_fallthru
    _
  %p15 = scmp.eq.s32.totalorder 0, 0
  // Predicated region
  $region14: #{gcn_forward.7} parent=0 // pred_check
    %p16 = pneg %p15
  $region15: #{gcn_forward.7} parent=0 // pred_check_branch
    %18 = sbr.rel (%p16) target = $region17
  $region16: #{gcn_forward.7} parent=0 // pred_region
    %19 = vst [vmem:[#allocation2] sm:$0xff] 0.0
    %20 = vst [vmem:[#allocation2 + $0x8] sm:$0xff] 0.0
    %21 = vst [vmem:[#allocation2 + $0x10] sm:$0xff] 0.0
    %22 = vst [vmem:[#allocation2 + $0x18] sm:$0xff] 0.0
    %23 = vst [vmem:[#allocation2 + $0x20] sm:$0xff] 0.0
    %24 = vst [vmem:[#allocation2 + $0x28] sm:$0xff] 0.0
    %25 = vst [vmem:[#allocation2 + $0x30] sm:$0xff] 0.0
    %26 = vst [vmem:[#allocation2 + $0x38] sm:$0xff] 0.0
    %27 = vst [vmem:[#allocation2 + $0x40] sm:$0xff] 0.0
    %28 = vst [vmem:[#allocation2 + $0x48] sm:$0xff] 0.0
    %29 = vst [vmem:[#allocation2 + $0x50] sm:$0xff] 0.0
    %30 = vst [vmem:[#allocation2 + $0x58] sm:$0xff] 0.0
    %31 = vst [vmem:[#allocation2 + $0x60] sm:$0xff] 0.0
    %32 = vst [vmem:[#allocation2 + $0x68] sm:$0xff] 0.0
    %33 = vst [vmem:[#allocation2 + $0x70] sm:$0xff] 0.0
    %34 = vst [vmem:[#allocation2 + $0x78] sm:$0xff] 0.0
  $region17: #{gcn_forward.7} parent=0 // pred_fallthru
    _
  %s35 = smul.u32 0, 128
  %s36 = sshra.s32 %s35, 3
  %s37 = sand.u32 %s35, 7
  %s38 = smul.addr %s36, 4
  %s39 = scalar_lea.vmem %s1, %s38
  %v40 = vld [vmem:[%s39] sm:$0xf]
  %v41 = vld [vmem:[%s39 + $0x4] sm:$0xf]
  %v42 = vld [vmem:[%s39 + $0x8] sm:$0xf]
  %v43 = vld [vmem:[%s39 + $0xc] sm:$0xf]
  %v44 = vld [vmem:[%s39 + $0x10] sm:$0xf]
  %v45 = vld [vmem:[%s39 + $0x14] sm:$0xf]
  %v46 = vld [vmem:[%s39 + $0x18] sm:$0xf]
  %v47 = vld [vmem:[%s39 + $0x1c] sm:$0xf]
  %v48 = vld [vmem:[%s39 + $0x20] sm:$0xf]
  %v49 = vld [vmem:[%s39 + $0x24] sm:$0xf]
  %v50 = vld [vmem:[%s39 + $0x28] sm:$0xf]
  %v51 = vld [vmem:[%s39 + $0x2c] sm:$0xf]
  %v52 = vld [vmem:[%s39 + $0x30] sm:$0xf]
  %v53 = vld [vmem:[%s39 + $0x34] sm:$0xf]
  %v54 = vld [vmem:[%s39 + $0x38] sm:$0xf]
  %v55 = vld [vmem:[%s39 + $0x3c] sm:$0xf]
  %v56 = vld [vmem:[#allocation2] sm:$0xff]
  %v57 = vld [vmem:[#allocation2 + $0x8] sm:$0xff]
  %v58 = vld [vmem:[#allocation2 + $0x10] sm:$0xff]
  %v59 = vld [vmem:[#allocation2 + $0x18] sm:$0xff]
  %v60 = vld [vmem:[#allocation2 + $0x20] sm:$0xff]
  %v61 = vld [vmem:[#allocation2 + $0x28] sm:$0xff]
  %v62 = vld [vmem:[#allocation2 + $0x30] sm:$0xff]
  %v63 = vld [vmem:[#allocation2 + $0x38] sm:$0xff]
  %v64 = vld [vmem:[#allocation2 + $0x40] sm:$0xff]
  %v65 = vld [vmem:[#allocation2 + $0x48] sm:$0xff]
  %v66 = vld [vmem:[#allocation2 + $0x50] sm:$0xff]
  %v67 = vld [vmem:[#allocation2 + $0x58] sm:$0xff]
  %v68 = vld [vmem:[#allocation2 + $0x60] sm:$0xff]
  %v69 = vld [vmem:[#allocation2 + $0x68] sm:$0xff]
  %v70 = vld [vmem:[#allocation2 + $0x70] sm:$0xff]
  %v71 = vld [vmem:[#allocation2 + $0x78] sm:$0xff]
  %v72 = vld [vmem:[%s0] sm:$0xf]
  %v73 = vld [vmem:[%s0 + $0x4] sm:$0xf]
  %v74 = vld [vmem:[%s0 + $0x8] sm:$0xf]
  %v75 = vld [vmem:[%s0 + $0xc] sm:$0xf]
  %v76 = vld [vmem:[%s0 + $0x10] sm:$0xf]
  %v77 = vld [vmem:[%s0 + $0x14] sm:$0xf]
  %v78 = vld [vmem:[%s0 + $0x18] sm:$0xf]
  %v79 = vld [vmem:[%s0 + $0x1c] sm:$0xf]
  %v80 = vld [vmem:[%s0 + $0x20] sm:$0xf]
  %v81 = vld [vmem:[%s0 + $0x24] sm:$0xf]
  %v82 = vld [vmem:[%s0 + $0x28] sm:$0xf]
  %v83 = vld [vmem:[%s0 + $0x2c] sm:$0xf]
  %v84 = vld [vmem:[%s0 + $0x30] sm:$0xf]
  %v85 = vld [vmem:[%s0 + $0x34] sm:$0xf]
  %v86 = vld [vmem:[%s0 + $0x38] sm:$0xf]
  %v87 = vld [vmem:[%s0 + $0x3c] sm:$0xf]
  %v104 = vunpack.c.l.b16 %v72
  %v105 = vunpack.c.l.b16 %v73
  %v106 = vunpack.c.l.b16 %v74
  %v107 = vunpack.c.l.b16 %v75
  %v108 = vunpack.c.l.b16 %v76
  %v109 = vunpack.c.l.b16 %v77
  %v110 = vunpack.c.l.b16 %v78
  %v111 = vunpack.c.l.b16 %v79
  %v112 = vunpack.c.l.b16 %v80
  %v113 = vunpack.c.l.b16 %v81
  %v114 = vunpack.c.l.b16 %v82
  %v115 = vunpack.c.l.b16 %v83
  %v116 = vunpack.c.l.b16 %v84
  %v117 = vunpack.c.l.b16 %v85
  %v118 = vunpack.c.l.b16 %v86
  %v119 = vunpack.c.l.b16 %v87
  %v120 = vpack.c.b16 %v105, %v104
  %v121 = vpack.c.b16 %v107, %v106
  %v122 = vpack.c.b16 %v109, %v108
  %v123 = vpack.c.b16 %v111, %v110
  %v124 = vpack.c.b16 %v113, %v112
  %v125 = vpack.c.b16 %v115, %v114
  %v126 = vpack.c.b16 %v117, %v116
  %v127 = vpack.c.b16 %v119, %v118
  %v152 = vunpack.c.l.b16 %v40
  %v153 = vunpack.c.l.b16 %v41
  %v154 = vunpack.c.l.b16 %v42
  %v155 = vunpack.c.l.b16 %v43
  %v156 = vunpack.c.l.b16 %v44
  %v157 = vunpack.c.l.b16 %v45
  %v158 = vunpack.c.l.b16 %v46
  %v159 = vunpack.c.l.b16 %v47
  %v160 = vunpack.c.l.b16 %v48
  %v161 = vunpack.c.l.b16 %v49
  %v162 = vunpack.c.l.b16 %v50
  %v163 = vunpack.c.l.b16 %v51
  %v164 = vunpack.c.l.b16 %v52
  %v165 = vunpack.c.l.b16 %v53
  %v166 = vunpack.c.l.b16 %v54
  %v167 = vunpack.c.l.b16 %v55
  %v168 = vpack.c.b16 %v153, %v152
  %v169 = vpack.c.b16 %v155, %v154
  %v170 = vpack.c.b16 %v157, %v156
  %v171 = vpack.c.b16 %v159, %v158
  %v172 = vpack.c.b16 %v161, %v160
  %v173 = vpack.c.b16 %v163, %v162
  %v174 = vpack.c.b16 %v165, %v164
  %v175 = vpack.c.b16 %v167, %v166
  %184 = vmatprep.subr.bf16.mxu0 0
  %185 = vmatpush1.bf16.msra.mxu0 %v168
  %186 = vmatprep.subr.bf16.mxu0 0
  %187 = vmatpush1.bf16.msra.mxu0 %v169
  %188 = vmatprep.subr.bf16.mxu0 0
  %189 = vmatpush1.bf16.msra.mxu0 %v170
  %190 = vmatprep.subr.bf16.mxu0 0
  %191 = vmatpush1.bf16.msra.mxu0 %v171
  %192 = vmatprep.subr.bf16.mxu0 0
  %193 = vmatpush1.bf16.msra.mxu0 %v172
  %194 = vmatprep.subr.bf16.mxu0 0
  %195 = vmatpush1.bf16.msra.mxu0 %v173
  %196 = vmatprep.subr.bf16.mxu0 0
  %197 = vmatpush1.bf16.msra.mxu0 %v174
  %198 = vmatprep.subr.bf16.mxu0 0
  %199 = vmatpush1.bf16.msra.mxu0 %v175
  %200 = vmatprep.subr.bf16.mxu0 0
  %201 = vmatpush1.bf16.msra.mxu0 0
  %202 = vmatprep.subr.bf16.mxu0 0
  %203 = vmatpush1.bf16.msra.mxu0 0
  %204 = vmatprep.subr.bf16.mxu0 0
  %205 = vmatpush1.bf16.msra.mxu0 0
  %206 = vmatprep.subr.bf16.mxu0 0
  %207 = vmatpush1.bf16.msra.mxu0 0
  %208 = vmatprep.subr.bf16.mxu0 0
  %209 = vmatpush1.bf16.msra.mxu0 0
  %210 = vmatprep.subr.bf16.mxu0 0
  %211 = vmatpush1.bf16.msra.mxu0 0
  %212 = vmatprep.subr.bf16.mxu0 0
  %213 = vmatpush1.bf16.msra.mxu0 0
  %214 = vmatprep.subr.bf16.mxu0 0
  %215 = vmatpush1.bf16.msra.mxu0 0
  %216 = vmatprep.mubr.bf16.mxu0 0
  %217 = vmatmul.mubr.bf16.gmra.mrb[0].mxu0 %v120
  %v218 = vpop.f32.mrb[0].mxu0
  %v219 = vadd.f32 0.0, %v218
  %v220 = vpop.f32.mrb[0].mxu0
  %v221 = vpop.f32.mrb[0].mxu0
  %v222 = vadd.f32 0.0, %v221
  %v223 = vpop.f32.mrb[0].mxu0
  %224 = vmatprep.mubr.bf16.mxu0 0
  %225 = vmatmul.mubr.bf16.gmra.mrb[0].mxu0 %v121
  %v226 = vpop.f32.mrb[0].mxu0
  %v227 = vadd.f32 0.0, %v226
  %v228 = vpop.f32.mrb[0].mxu0
  %v229 = vpop.f32.mrb[0].mxu0
  %v230 = vadd.f32 0.0, %v229
  %v231 = vpop.f32.mrb[0].mxu0
  %232 = vmatprep.mubr.bf16.mxu0 0
  %233 = vmatmul.mubr.bf16.gmra.mrb[0].mxu0 %v122
  %v234 = vpop.f32.mrb[0].mxu0
  %v235 = vadd.f32 0.0, %v234
  %v236 = vpop.f32.mrb[0].mxu0
  %v237 = vpop.f32.mrb[0].mxu0
  %v238 = vadd.f32 0.0, %v237
  %v239 = vpop.f32.mrb[0].mxu0
  %240 = vmatprep.mubr.bf16.mxu0 0
  %241 = vmatmul.mubr.bf16.gmra.mrb[0].mxu0 %v123
  %v242 = vpop.f32.mrb[0].mxu0
  %v243 = vadd.f32 0.0, %v242
  %v244 = vpop.f32.mrb[0].mxu0
  %v245 = vpop.f32.mrb[0].mxu0
  %v246 = vadd.f32 0.0, %v245
  %v247 = vpop.f32.mrb[0].mxu0
  %248 = vmatprep.mubr.bf16.mxu0 0
  %249 = vmatmul.mubr.bf16.gmra.mrb[0].mxu0 %v124
  %v250 = vpop.f32.mrb[0].mxu0
  %v251 = vadd.f32 0.0, %v250
  %v252 = vpop.f32.mrb[0].mxu0
  %v253 = vpop.f32.mrb[0].mxu0
  %v254 = vadd.f32 0.0, %v253
  %v255 = vpop.f32.mrb[0].mxu0
  %256 = vmatprep.mubr.bf16.mxu0 0
  %257 = vmatmul.mubr.bf16.gmra.mrb[0].mxu0 %v125
  %v258 = vpop.f32.mrb[0].mxu0
  %v259 = vadd.f32 0.0, %v258
  %v260 = vpop.f32.mrb[0].mxu0
  %v261 = vpop.f32.mrb[0].mxu0
  %v262 = vadd.f32 0.0, %v261
  %v263 = vpop.f32.mrb[0].mxu0
  %264 = vmatprep.mubr.bf16.mxu0 0
  %265 = vmatmul.mubr.bf16.gmra.mrb[0].mxu0 %v126
  %v266 = vpop.f32.mrb[0].mxu0
  %v267 = vadd.f32 0.0, %v266
  %v268 = vpop.f32.mrb[0].mxu0
  %v269 = vpop.f32.mrb[0].mxu0
  %v270 = vadd.f32 0.0, %v269
  %v271 = vpop.f32.mrb[0].mxu0
  %272 = vmatprep.mubr.bf16.mxu0 0
  %273 = vmatmul.mubr.bf16.gmra.mrb[0].mxu0 %v127
  %v274 = vpop.f32.mrb[0].mxu0
  %v275 = vadd.f32 0.0, %v274
  %v276 = vpop.f32.mrb[0].mxu0
  %v277 = vpop.f32.mrb[0].mxu0
  %v278 = vadd.f32 0.0, %v277
  %v279 = vpop.f32.mrb[0].mxu0
  %280 = vdwg.mxu0
  %v281 = vadd.f32 %v56, %v219
  %v282 = vadd.f32 %v57, %v222
  %v283 = vadd.f32 %v58, %v227
  %v284 = vadd.f32 %v59, %v230
  %v285 = vadd.f32 %v60, %v235
  %v286 = vadd.f32 %v61, %v238
  %v287 = vadd.f32 %v62, %v243
  %v288 = vadd.f32 %v63, %v246
  %v289 = vadd.f32 %v64, %v251
  %v290 = vadd.f32 %v65, %v254
  %v291 = vadd.f32 %v66, %v259
  %v292 = vadd.f32 %v67, %v262
  %v293 = vadd.f32 %v68, %v267
  %v294 = vadd.f32 %v69, %v270
  %v295 = vadd.f32 %v70, %v275
  %v296 = vadd.f32 %v71, %v278
  %297 = vst [vmem:[#allocation2] sm:$0xff] %v281
  %298 = vst [vmem:[#allocation2 + $0x8] sm:$0xff] %v282
  %299 = vst [vmem:[#allocation2 + $0x10] sm:$0xff] %v283
  %300 = vst [vmem:[#allocation2 + $0x18] sm:$0xff] %v284
  %301 = vst [vmem:[#allocation2 + $0x20] sm:$0xff] %v285
  %302 = vst [vmem:[#allocation2 + $0x28] sm:$0xff] %v286
  %303 = vst [vmem:[#allocation2 + $0x30] sm:$0xff] %v287
  %304 = vst [vmem:[#allocation2 + $0x38] sm:$0xff] %v288
  %305 = vst [vmem:[#allocation2 + $0x40] sm:$0xff] %v289
  %306 = vst [vmem:[#allocation2 + $0x48] sm:$0xff] %v290
  %307 = vst [vmem:[#allocation2 + $0x50] sm:$0xff] %v291
  %308 = vst [vmem:[#allocation2 + $0x58] sm:$0xff] %v292
  %309 = vst [vmem:[#allocation2 + $0x60] sm:$0xff] %v293
  %310 = vst [vmem:[#allocation2 + $0x68] sm:$0xff] %v294
  %311 = vst [vmem:[#allocation2 + $0x70] sm:$0xff] %v295
  %312 = vst [vmem:[#allocation2 + $0x78] sm:$0xff] %v296
  // Predicated region
  $region18: #{gcn_forward.7} parent=0 // pred_check
    %p313 = pneg %p15
  $region19: #{gcn_forward.7} parent=0 // pred_check_branch
    %315 = sbr.rel (%p313) target = $region21
  $region20: #{gcn_forward.7} parent=0 // pred_region
    %v316 = vld [vmem:[#allocation2] sm:$0xff]
    %v317 = vld [vmem:[#allocation2 + $0x8] sm:$0xff]
    %v318 = vld [vmem:[#allocation2 + $0x10] sm:$0xff]
    %v319 = vld [vmem:[#allocation2 + $0x18] sm:$0xff]
    %v320 = vld [vmem:[#allocation2 + $0x20] sm:$0xff]
    %v321 = vld [vmem:[#allocation2 + $0x28] sm:$0xff]
    %v322 = vld [vmem:[#allocation2 + $0x30] sm:$0xff]
    %v323 = vld [vmem:[#allocation2 + $0x38] sm:$0xff]
    %v324 = vld [vmem:[#allocation2 + $0x40] sm:$0xff]
    %v325 = vld [vmem:[#allocation2 + $0x48] sm:$0xff]
    %v326 = vld [vmem:[#allocation2 + $0x50] sm:$0xff]
    %v327 = vld [vmem:[#allocation2 + $0x58] sm:$0xff]
    %v328 = vld [vmem:[#allocation2 + $0x60] sm:$0xff]
    %v329 = vld [vmem:[#allocation2 + $0x68] sm:$0xff]
    %v330 = vld [vmem:[#allocation2 + $0x70] sm:$0xff]
    %v331 = vld [vmem:[#allocation2 + $0x78] sm:$0xff]
    %v332 = vld [vmem:[%s2] sm:$0x1]
    %v334 = vlaneseq
    %v335 = vshrl.u32 %v334, 7
    %v336 = vsub.s32 0, %v335
    %v337 = vrot.slane %v332, %v336
    %v339 = vadd.f32 %v316, %v337
    %v340 = vadd.f32 %v317, %v337
    %v341 = vadd.f32 %v318, %v337
    %v342 = vadd.f32 %v319, %v337
    %v343 = vadd.f32 %v320, %v337
    %v344 = vadd.f32 %v321, %v337
    %v345 = vadd.f32 %v322, %v337
    %v346 = vadd.f32 %v323, %v337
    %v347 = vadd.f32 %v324, %v337
    %v348 = vadd.f32 %v325, %v337
    %v349 = vadd.f32 %v326, %v337
    %v350 = vadd.f32 %v327, %v337
    %v351 = vadd.f32 %v328, %v337
    %v352 = vadd.f32 %v329, %v337
    %v353 = vadd.f32 %v330, %v337
    %v354 = vadd.f32 %v331, %v337
    %v355 = vlaneseq
    %v356 = vand.u32 %v355, 127
    %vm357 = vcmp.lt.s32.totalorder %v356, 8
    %v358 = vsel %vm357, %v339, -3.4028235e+38
    %v359 = vsel %vm357, %v340, -3.4028235e+38
    %v360 = vsel %vm357, %v341, -3.4028235e+38
    %v361 = vsel %vm357, %v342, -3.4028235e+38
    %v362 = vsel %vm357, %v343, -3.4028235e+38
    %v363 = vsel %vm357, %v344, -3.4028235e+38
    %v364 = vsel %vm357, %v345, -3.4028235e+38
    %v365 = vsel %vm357, %v346, -3.4028235e+38
    %v366 = vsel %vm357, %v347, -3.4028235e+38
    %v367 = vsel %vm357, %v348, -3.4028235e+38
    %v368 = vsel %vm357, %v349, -3.4028235e+38
    %v369 = vsel %vm357, %v350, -3.4028235e+38
    %v370 = vsel %vm357, %v351, -3.4028235e+38
    %v371 = vsel %vm357, %v352, -3.4028235e+38
    %v372 = vsel %vm357, %v353, -3.4028235e+38
    %v373 = vsel %vm357, %v354, -3.4028235e+38
    %374 = vmax.xlane.f32.xlu0 %v358
    %v375 = vpop.xlane.xlu0 %374
    %376 = vmax.xlane.f32.xlu0 %v359
    %v377 = vpop.xlane.xlu0 %376
    %378 = vmax.xlane.f32.xlu0 %v360
    %v379 = vpop.xlane.xlu0 %378
    %380 = vmax.xlane.f32.xlu0 %v361
    %v381 = vpop.xlane.xlu0 %380
    %382 = vmax.xlane.f32.xlu0 %v362
    %v383 = vpop.xlane.xlu0 %382
    %384 = vmax.xlane.f32.xlu0 %v363
    %v385 = vpop.xlane.xlu0 %384
    %386 = vmax.xlane.f32.xlu0 %v364
    %v387 = vpop.xlane.xlu0 %386
    %388 = vmax.xlane.f32.xlu0 %v365
    %v389 = vpop.xlane.xlu0 %388
    %390 = vmax.xlane.f32.xlu0 %v366
    %v391 = vpop.xlane.xlu0 %390
    %392 = vmax.xlane.f32.xlu0 %v367
    %v393 = vpop.xlane.xlu0 %392
    %394 = vmax.xlane.f32.xlu0 %v368
    %v395 = vpop.xlane.xlu0 %394
    %396 = vmax.xlane.f32.xlu0 %v369
    %v397 = vpop.xlane.xlu0 %396
    %398 = vmax.xlane.f32.xlu0 %v370
    %v399 = vpop.xlane.xlu0 %398
    %400 = vmax.xlane.f32.xlu0 %v371
    %v401 = vpop.xlane.xlu0 %400
    %402 = vmax.xlane.f32.xlu0 %v372
    %v403 = vpop.xlane.xlu0 %402
    %404 = vmax.xlane.f32.xlu0 %v373
    %v405 = vpop.xlane.xlu0 %404
    %v406 = vsub.f32 %v358, %v375
    %v407 = vsub.f32 %v359, %v377
    %v408 = vsub.f32 %v360, %v379
    %v409 = vsub.f32 %v361, %v381
    %v410 = vsub.f32 %v362, %v383
    %v411 = vsub.f32 %v363, %v385
    %v412 = vsub.f32 %v364, %v387
    %v413 = vsub.f32 %v365, %v389
    %v414 = vsub.f32 %v366, %v391
    %v415 = vsub.f32 %v367, %v393
    %v416 = vsub.f32 %v368, %v395
    %v417 = vsub.f32 %v369, %v397
    %v418 = vsub.f32 %v370, %v399
    %v419 = vsub.f32 %v371, %v401
    %v420 = vsub.f32 %v372, %v403
    %v421 = vsub.f32 %v373, %v405
    %v422 = vmul.f32 %v406, 1.442695
    %v423 = vpow.pop %v422
    %v424 = vmul.f32 %v407, 1.442695
    %v425 = vpow.pop %v424
    %v426 = vmul.f32 %v408, 1.442695
    %v427 = vpow.pop %v426
    %v428 = vmul.f32 %v409, 1.442695
    %v429 = vpow.pop %v428
    %v430 = vmul.f32 %v410, 1.442695
    %v431 = vpow.pop %v430
    %v432 = vmul.f32 %v411, 1.442695
    %v433 = vpow.pop %v432
    %v434 = vmul.f32 %v412, 1.442695
    %v435 = vpow.pop %v434
    %v436 = vmul.f32 %v413, 1.442695
    %v437 = vpow.pop %v436
    %v438 = vmul.f32 %v414, 1.442695
    %v439 = vpow.pop %v438
    %v440 = vmul.f32 %v415, 1.442695
    %v441 = vpow.pop %v440
    %v442 = vmul.f32 %v416, 1.442695
    %v443 = vpow.pop %v442
    %v444 = vmul.f32 %v417, 1.442695
    %v445 = vpow.pop %v444
    %v446 = vmul.f32 %v418, 1.442695
    %v447 = vpow.pop %v446
    %v448 = vmul.f32 %v419, 1.442695
    %v449 = vpow.pop %v448
    %v450 = vmul.f32 %v420, 1.442695
    %v451 = vpow.pop %v450
    %v452 = vmul.f32 %v421, 1.442695
    %v453 = vpow.pop %v452
    %v454 = vsel %vm357, %v423, 0.0
    %v455 = vsel %vm357, %v425, 0.0
    %v456 = vsel %vm357, %v427, 0.0
    %v457 = vsel %vm357, %v429, 0.0
    %v458 = vsel %vm357, %v431, 0.0
    %v459 = vsel %vm357, %v433, 0.0
    %v460 = vsel %vm357, %v435, 0.0
    %v461 = vsel %vm357, %v437, 0.0
    %v462 = vsel %vm357, %v439, 0.0
    %v463 = vsel %vm357, %v441, 0.0
    %v464 = vsel %vm357, %v443, 0.0
    %v465 = vsel %vm357, %v445, 0.0
    %v466 = vsel %vm357, %v447, 0.0
    %v467 = vsel %vm357, %v449, 0.0
    %v468 = vsel %vm357, %v451, 0.0
    %v469 = vsel %vm357, %v453, 0.0
    %470 = vadd.xlane.f32.xlu0 %v454
    %v471 = vpop.xlane.xlu0 %470
    %472 = vadd.xlane.f32.xlu0 %v455
    %v473 = vpop.xlane.xlu0 %472
    %474 = vadd.xlane.f32.xlu0 %v456
    %v475 = vpop.xlane.xlu0 %474
    %476 = vadd.xlane.f32.xlu0 %v457
    %v477 = vpop.xlane.xlu0 %476
    %478 = vadd.xlane.f32.xlu0 %v458
    %v479 = vpop.xlane.xlu0 %478
    %480 = vadd.xlane.f32.xlu0 %v459
    %v481 = vpop.xlane.xlu0 %480
    %482 = vadd.xlane.f32.xlu0 %v460
    %v483 = vpop.xlane.xlu0 %482
    %484 = vadd.xlane.f32.xlu0 %v461
    %v485 = vpop.xlane.xlu0 %484
    %486 = vadd.xlane.f32.xlu0 %v462
    %v487 = vpop.xlane.xlu0 %486
    %488 = vadd.xlane.f32.xlu0 %v463
    %v489 = vpop.xlane.xlu0 %488
    %490 = vadd.xlane.f32.xlu0 %v464
    %v491 = vpop.xlane.xlu0 %490
    %492 = vadd.xlane.f32.xlu0 %v465
    %v493 = vpop.xlane.xlu0 %492
    %494 = vadd.xlane.f32.xlu0 %v466
    %v495 = vpop.xlane.xlu0 %494
    %496 = vadd.xlane.f32.xlu0 %v467
    %v497 = vpop.xlane.xlu0 %496
    %498 = vadd.xlane.f32.xlu0 %v468
    %v499 = vpop.xlane.xlu0 %498
    %500 = vadd.xlane.f32.xlu0 %v469
    %v501 = vpop.xlane.xlu0 %500
    %v502 = vlog2.pop %v471
    %v503 = vmul.f32 %v502, 0.6931472
    %v504 = vlog2.pop %v473
    %v505 = vmul.f32 %v504, 0.6931472
    %v506 = vlog2.pop %v475
    %v507 = vmul.f32 %v506, 0.6931472
    %v508 = vlog2.pop %v477
    %v509 = vmul.f32 %v508, 0.6931472
    %v510 = vlog2.pop %v479
    %v511 = vmul.f32 %v510, 0.6931472
    %v512 = vlog2.pop %v481
    %v513 = vmul.f32 %v512, 0.6931472
    %v514 = vlog2.pop %v483
    %v515 = vmul.f32 %v514, 0.6931472
    %v516 = vlog2.pop %v485
    %v517 = vmul.f32 %v516, 0.6931472
    %v518 = vlog2.pop %v487
    %v519 = vmul.f32 %v518, 0.6931472
    %v520 = vlog2.pop %v489
    %v521 = vmul.f32 %v520, 0.6931472
    %v522 = vlog2.pop %v491
    %v523 = vmul.f32 %v522, 0.6931472
    %v524 = vlog2.pop %v493
    %v525 = vmul.f32 %v524, 0.6931472
    %v526 = vlog2.pop %v495
    %v527 = vmul.f32 %v526, 0.6931472
    %v528 = vlog2.pop %v497
    %v529 = vmul.f32 %v528, 0.6931472
    %v530 = vlog2.pop %v499
    %v531 = vmul.f32 %v530, 0.6931472
    %v532 = vlog2.pop %v501
    %v533 = vmul.f32 %v532, 0.6931472
    %v534 = vsub.f32 %v406, %v503
    %v535 = vsub.f32 %v407, %v505
    %v536 = vsub.f32 %v408, %v507
    %v537 = vsub.f32 %v409, %v509
    %v538 = vsub.f32 %v410, %v511
    %v539 = vsub.f32 %v411, %v513
    %v540 = vsub.f32 %v412, %v515
    %v541 = vsub.f32 %v413, %v517
    %v542 = vsub.f32 %v414, %v519
    %v543 = vsub.f32 %v415, %v521
    %v544 = vsub.f32 %v416, %v523
    %v545 = vsub.f32 %v417, %v525
    %v546 = vsub.f32 %v418, %v527
    %v547 = vsub.f32 %v419, %v529
    %v548 = vsub.f32 %v420, %v531
    %v549 = vsub.f32 %v421, %v533
    %550 = vst [vmem:[%s3] sm:$0xff] %v534
    %551 = vst [vmem:[%s3 + $0x8] sm:$0xff] %v535
    %552 = vst [vmem:[%s3 + $0x10] sm:$0xff] %v536
    %553 = vst [vmem:[%s3 + $0x18] sm:$0xff] %v537
    %554 = vst [vmem:[%s3 + $0x20] sm:$0xff] %v538
    %555 = vst [vmem:[%s3 + $0x28] sm:$0xff] %v539
    %556 = vst [vmem:[%s3 + $0x30] sm:$0xff] %v540
    %557 = vst [vmem:[%s3 + $0x38] sm:$0xff] %v541
    %558 = vst [vmem:[%s3 + $0x40] sm:$0xff] %v542
    %559 = vst [vmem:[%s3 + $0x48] sm:$0xff] %v543
    %560 = vst [vmem:[%s3 + $0x50] sm:$0xff] %v544
    %561 = vst [vmem:[%s3 + $0x58] sm:$0xff] %v545
    %562 = vst [vmem:[%s3 + $0x60] sm:$0xff] %v546
    %563 = vst [vmem:[%s3 + $0x68] sm:$0xff] %v547
    %564 = vst [vmem:[%s3 + $0x70] sm:$0xff] %v548
    %565 = vst [vmem:[%s3 + $0x78] sm:$0xff] %v549
  $region21: #{gcn_forward.7} parent=0 // pred_fallthru
    _
  // Predicated region
  $region22: #{gcn_forward.7} parent=0 // pred_check
    _
  $region23: #{gcn_forward.7} parent=0 // pred_check_branch
    %567 = sbr.rel (0) target = $region25
  $region24: #{gcn_forward.7} parent=0 // pred_region
    _
  $region25: #{gcn_forward.7} parent=0 // pred_fallthru
    _
  // Predicated region
  $region26: #{gcn_forward.7} parent=0 // pred_check
    _
  $region27: #{gcn_forward.7} parent=0 // pred_check_branch
    %569 = sbr.rel (0) target = $region29
  $region28: #{gcn_forward.7} parent=0 // pred_region
    _
  $region29: #{gcn_forward.7} parent=0 // pred_fallthru
    _

// kernel: gcn_forward.5
$region0: #{gcn_forward.5}
  #allocation0 [shape = 'u32[]', space=smem, size = 0x4, offset = 0x4, fixed_abs, tag = 'smem constant byte address 0x4 - core index']
  #allocation1 [shape = 'u32[144,128]{1,0:T(1,128)}', space=vmem, size = 0x12000, scoped, tag = 'internal scratch']
  #allocation2 [shape = 'f32[128,128]{1,0:T(8,128)}', space=vmem, size = 0x10000, scoped, tag = 'scratch operand']
  %s0 = inlined_call_operand.vmem [shape: bf16[128,128], index: 0, kind: input, shape index: {}]
  %s1 = inlined_call_operand.vmem [shape: bf16[128,128], index: 1, kind: input, shape index: {}]
  %s2 = inlined_call_operand.vmem [shape: f32[1,128], index: 2, kind: input, shape index: {}]
  %s3 = inlined_call_operand.vmem [shape: bf16[128,128], index: 3, kind: output, shape index: {}]
  %s4 = sld [smem:[#allocation0]]
  $region30: #{gcn_forward.5} parent=0
    _
  %s6 = ssub.s32 1, %s4
  %s7 = scalar_select 0, %s6, %s4
  // Predicated region
  $region2: #{gcn_forward.5} parent=0 // pred_check
    _
  $region3: #{gcn_forward.5} parent=0 // pred_check_branch
    %9 = sbr.rel (0) target = $region5
  $region4: #{gcn_forward.5} parent=0 // pred_region
    _
  $region5: #{gcn_forward.5} parent=0 // pred_fallthru
    _
  // Predicated region
  $region6: #{gcn_forward.5} parent=0 // pred_check
    _
  $region7: #{gcn_forward.5} parent=0 // pred_check_branch
    %11 = sbr.rel (0) target = $region9
  $region8: #{gcn_forward.5} parent=0 // pred_region
    _
  $region9: #{gcn_forward.5} parent=0 // pred_fallthru
    _
  // Predicated region
  $region10: #{gcn_forward.5} parent=0 // pred_check
    _
  $region11: #{gcn_forward.5} parent=0 // pred_check_branch
    %13 = sbr.rel (0) target = $region13
  $region12: #{gcn_forward.5} parent=0 // pred_region
    _
  $region13: #{gcn_forward.5} parent=0 // pred_fallthru
    _
  %p15 = scmp.eq.s32.totalorder 0, 0
  // Predicated region
  $region14: #{gcn_forward.5} parent=0 // pred_check
    %p16 = pneg %p15
  $region15: #{gcn_forward.5} parent=0 // pred_check_branch
    %18 = sbr.rel (%p16) target = $region17
  $region16: #{gcn_forward.5} parent=0 // pred_region
    %19 = vst [vmem:[#allocation2] sm:$0xff] 0.0
    %20 = vst [vmem:[#allocation2 + $0x8] sm:$0xff] 0.0
    %21 = vst [vmem:[#allocation2 + $0x10] sm:$0xff] 0.0
    %22 = vst [vmem:[#allocation2 + $0x18] sm:$0xff] 0.0
    %23 = vst [vmem:[#allocation2 + $0x20] sm:$0xff] 0.0
    %24 = vst [vmem:[#allocation2 + $0x28] sm:$0xff] 0.0
    %25 = vst [vmem:[#allocation2 + $0x30] sm:$0xff] 0.0
    %26 = vst [vmem:[#allocation2 + $0x38] sm:$0xff] 0.0
    %27 = vst [vmem:[#allocation2 + $0x40] sm:$0xff] 0.0
    %28 = vst [vmem:[#allocation2 + $0x48] sm:$0xff] 0.0
    %29 = vst [vmem:[#allocation2 + $0x50] sm:$0xff] 0.0
    %30 = vst [vmem:[#allocation2 + $0x58] sm:$0xff] 0.0
    %31 = vst [vmem:[#allocation2 + $0x60] sm:$0xff] 0.0
    %32 = vst [vmem:[#allocation2 + $0x68] sm:$0xff] 0.0
    %33 = vst [vmem:[#allocation2 + $0x70] sm:$0xff] 0.0
    %34 = vst [vmem:[#allocation2 + $0x78] sm:$0xff] 0.0
  $region17: #{gcn_forward.5} parent=0 // pred_fallthru
    _
  %s35 = smul.u32 0, 128
  %s36 = sshra.s32 %s35, 3
  %s37 = sand.u32 %s35, 7
  %s38 = smul.addr %s36, 4
  %s39 = scalar_lea.vmem %s1, %s38
  %v40 = vld [vmem:[%s39] sm:$0xf]
  %v41 = vld [vmem:[%s39 + $0x4] sm:$0xf]
  %v42 = vld [vmem:[%s39 + $0x8] sm:$0xf]
  %v43 = vld [vmem:[%s39 + $0xc] sm:$0xf]
  %v44 = vld [vmem:[%s39 + $0x10] sm:$0xf]
  %v45 = vld [vmem:[%s39 + $0x14] sm:$0xf]
  %v46 = vld [vmem:[%s39 + $0x18] sm:$0xf]
  %v47 = vld [vmem:[%s39 + $0x1c] sm:$0xf]
  %v48 = vld [vmem:[%s39 + $0x20] sm:$0xf]
  %v49 = vld [vmem:[%s39 + $0x24] sm:$0xf]
  %v50 = vld [vmem:[%s39 + $0x28] sm:$0xf]
  %v51 = vld [vmem:[%s39 + $0x2c] sm:$0xf]
  %v52 = vld [vmem:[%s39 + $0x30] sm:$0xf]
  %v53 = vld [vmem:[%s39 + $0x34] sm:$0xf]
  %v54 = vld [vmem:[%s39 + $0x38] sm:$0xf]
  %v55 = vld [vmem:[%s39 + $0x3c] sm:$0xf]
  %v56 = vld [vmem:[#allocation2] sm:$0xff]
  %v57 = vld [vmem:[#allocation2 + $0x8] sm:$0xff]
  %v58 = vld [vmem:[#allocation2 + $0x10] sm:$0xff]
  %v59 = vld [vmem:[#allocation2 + $0x18] sm:$0xff]
  %v60 = vld [vmem:[#allocation2 + $0x20] sm:$0xff]
  %v61 = vld [vmem:[#allocation2 + $0x28] sm:$0xff]
  %v62 = vld [vmem:[#allocation2 + $0x30] sm:$0xff]
  %v63 = vld [vmem:[#allocation2 + $0x38] sm:$0xff]
  %v64 = vld [vmem:[#allocation2 + $0x40] sm:$0xff]
  %v65 = vld [vmem:[#allocation2 + $0x48] sm:$0xff]
  %v66 = vld [vmem:[#allocation2 + $0x50] sm:$0xff]
  %v67 = vld [vmem:[#allocation2 + $0x58] sm:$0xff]
  %v68 = vld [vmem:[#allocation2 + $0x60] sm:$0xff]
  %v69 = vld [vmem:[#allocation2 + $0x68] sm:$0xff]
  %v70 = vld [vmem:[#allocation2 + $0x70] sm:$0xff]
  %v71 = vld [vmem:[#allocation2 + $0x78] sm:$0xff]
  %v72 = vld [vmem:[%s0] sm:$0xf]
  %v73 = vld [vmem:[%s0 + $0x4] sm:$0xf]
  %v74 = vld [vmem:[%s0 + $0x8] sm:$0xf]
  %v75 = vld [vmem:[%s0 + $0xc] sm:$0xf]
  %v76 = vld [vmem:[%s0 + $0x10] sm:$0xf]
  %v77 = vld [vmem:[%s0 + $0x14] sm:$0xf]
  %v78 = vld [vmem:[%s0 + $0x18] sm:$0xf]
  %v79 = vld [vmem:[%s0 + $0x1c] sm:$0xf]
  %v80 = vld [vmem:[%s0 + $0x20] sm:$0xf]
  %v81 = vld [vmem:[%s0 + $0x24] sm:$0xf]
  %v82 = vld [vmem:[%s0 + $0x28] sm:$0xf]
  %v83 = vld [vmem:[%s0 + $0x2c] sm:$0xf]
  %v84 = vld [vmem:[%s0 + $0x30] sm:$0xf]
  %v85 = vld [vmem:[%s0 + $0x34] sm:$0xf]
  %v86 = vld [vmem:[%s0 + $0x38] sm:$0xf]
  %v87 = vld [vmem:[%s0 + $0x3c] sm:$0xf]
  %v104 = vunpack.c.l.b16 %v72
  %v105 = vunpack.c.l.b16 %v73
  %v106 = vunpack.c.l.b16 %v74
  %v107 = vunpack.c.l.b16 %v75
  %v108 = vunpack.c.l.b16 %v76
  %v109 = vunpack.c.l.b16 %v77
  %v110 = vunpack.c.l.b16 %v78
  %v111 = vunpack.c.l.b16 %v79
  %v112 = vunpack.c.l.b16 %v80
  %v113 = vunpack.c.l.b16 %v81
  %v114 = vunpack.c.l.b16 %v82
  %v115 = vunpack.c.l.b16 %v83
  %v116 = vunpack.c.l.b16 %v84
  %v117 = vunpack.c.l.b16 %v85
  %v118 = vunpack.c.l.b16 %v86
  %v119 = vunpack.c.l.b16 %v87
  %v120 = vpack.c.b16 %v105, %v104
  %v121 = vpack.c.b16 %v107, %v106
  %v122 = vpack.c.b16 %v109, %v108
  %v123 = vpack.c.b16 %v111, %v110
  %v124 = vpack.c.b16 %v113, %v112
  %v125 = vpack.c.b16 %v115, %v114
  %v126 = vpack.c.b16 %v117, %v116
  %v127 = vpack.c.b16 %v119, %v118
  %v152 = vunpack.c.l.b16 %v40
  %v153 = vunpack.c.l.b16 %v41
  %v154 = vunpack.c.l.b16 %v42
  %v155 = vunpack.c.l.b16 %v43
  %v156 = vunpack.c.l.b16 %v44
  %v157 = vunpack.c.l.b16 %v45
  %v158 = vunpack.c.l.b16 %v46
  %v159 = vunpack.c.l.b16 %v47
  %v160 = vunpack.c.l.b16 %v48
  %v161 = vunpack.c.l.b16 %v49
  %v162 = vunpack.c.l.b16 %v50
  %v163 = vunpack.c.l.b16 %v51
  %v164 = vunpack.c.l.b16 %v52
  %v165 = vunpack.c.l.b16 %v53
  %v166 = vunpack.c.l.b16 %v54
  %v167 = vunpack.c.l.b16 %v55
  %v168 = vpack.c.b16 %v153, %v152
  %v169 = vpack.c.b16 %v155, %v154
  %v170 = vpack.c.b16 %v157, %v156
  %v171 = vpack.c.b16 %v159, %v158
  %v172 = vpack.c.b16 %v161, %v160
  %v173 = vpack.c.b16 %v163, %v162
  %v174 = vpack.c.b16 %v165, %v164
  %v175 = vpack.c.b16 %v167, %v166
  %184 = vmatprep.subr.bf16.mxu0 0
  %185 = vmatpush1.bf16.msra.mxu0 %v168
  %186 = vmatprep.subr.bf16.mxu0 0
  %187 = vmatpush1.bf16.msra.mxu0 %v169
  %188 = vmatprep.subr.bf16.mxu0 0
  %189 = vmatpush1.bf16.msra.mxu0 %v170
  %190 = vmatprep.subr.bf16.mxu0 0
  %191 = vmatpush1.bf16.msra.mxu0 %v171
  %192 = vmatprep.subr.bf16.mxu0 0
  %193 = vmatpush1.bf16.msra.mxu0 %v172
  %194 = vmatprep.subr.bf16.mxu0 0
  %195 = vmatpush1.bf16.msra.mxu0 %v173
  %196 = vmatprep.subr.bf16.mxu0 0
  %197 = vmatpush1.bf16.msra.mxu0 %v174
  %198 = vmatprep.subr.bf16.mxu0 0
  %199 = vmatpush1.bf16.msra.mxu0 %v175
  %200 = vmatprep.subr.bf16.mxu0 0
  %201 = vmatpush1.bf16.msra.mxu0 0
  %202 = vmatprep.subr.bf16.mxu0 0
  %203 = vmatpush1.bf16.msra.mxu0 0
  %204 = vmatprep.subr.bf16.mxu0 0
  %205 = vmatpush1.bf16.msra.mxu0 0
  %206 = vmatprep.subr.bf16.mxu0 0
  %207 = vmatpush1.bf16.msra.mxu0 0
  %208 = vmatprep.subr.bf16.mxu0 0
  %209 = vmatpush1.bf16.msra.mxu0 0
  %210 = vmatprep.subr.bf16.mxu0 0
  %211 = vmatpush1.bf16.msra.mxu0 0
  %212 = vmatprep.subr.bf16.mxu0 0
  %213 = vmatpush1.bf16.msra.mxu0 0
  %214 = vmatprep.subr.bf16.mxu0 0
  %215 = vmatpush1.bf16.msra.mxu0 0
  %216 = vmatprep.mubr.bf16.mxu0 0
  %217 = vmatmul.mubr.bf16.gmra.mrb[0].mxu0 %v120
  %v218 = vpop.f32.mrb[0].mxu0
  %v219 = vadd.f32 0.0, %v218
  %v220 = vpop.f32.mrb[0].mxu0
  %v221 = vpop.f32.mrb[0].mxu0
  %v222 = vadd.f32 0.0, %v221
  %v223 = vpop.f32.mrb[0].mxu0
  %224 = vmatprep.mubr.bf16.mxu0 0
  %225 = vmatmul.mubr.bf16.gmra.mrb[0].mxu0 %v121
  %v226 = vpop.f32.mrb[0].mxu0
  %v227 = vadd.f32 0.0, %v226
  %v228 = vpop.f32.mrb[0].mxu0
  %v229 = vpop.f32.mrb[0].mxu0
  %v230 = vadd.f32 0.0, %v229
  %v231 = vpop.f32.mrb[0].mxu0
  %232 = vmatprep.mubr.bf16.mxu0 0
  %233 = vmatmul.mubr.bf16.gmra.mrb[0].mxu0 %v122
  %v234 = vpop.f32.mrb[0].mxu0
  %v235 = vadd.f32 0.0, %v234
  %v236 = vpop.f32.mrb[0].mxu0
  %v237 = vpop.f32.mrb[0].mxu0
  %v238 = vadd.f32 0.0, %v237
  %v239 = vpop.f32.mrb[0].mxu0
  %240 = vmatprep.mubr.bf16.mxu0 0
  %241 = vmatmul.mubr.bf16.gmra.mrb[0].mxu0 %v123
  %v242 = vpop.f32.mrb[0].mxu0
  %v243 = vadd.f32 0.0, %v242
  %v244 = vpop.f32.mrb[0].mxu0
  %v245 = vpop.f32.mrb[0].mxu0
  %v246 = vadd.f32 0.0, %v245
  %v247 = vpop.f32.mrb[0].mxu0
  %248 = vmatprep.mubr.bf16.mxu0 0
  %249 = vmatmul.mubr.bf16.gmra.mrb[0].mxu0 %v124
  %v250 = vpop.f32.mrb[0].mxu0
  %v251 = vadd.f32 0.0, %v250
  %v252 = vpop.f32.mrb[0].mxu0
  %v253 = vpop.f32.mrb[0].mxu0
  %v254 = vadd.f32 0.0, %v253
  %v255 = vpop.f32.mrb[0].mxu0
  %256 = vmatprep.mubr.bf16.mxu0 0
  %257 = vmatmul.mubr.bf16.gmra.mrb[0].mxu0 %v125
  %v258 = vpop.f32.mrb[0].mxu0
  %v259 = vadd.f32 0.0, %v258
  %v260 = vpop.f32.mrb[0].mxu0
  %v261 = vpop.f32.mrb[0].mxu0
  %v262 = vadd.f32 0.0, %v261
  %v263 = vpop.f32.mrb[0].mxu0
  %264 = vmatprep.mubr.bf16.mxu0 0
  %265 = vmatmul.mubr.bf16.gmra.mrb[0].mxu0 %v126
  %v266 = vpop.f32.mrb[0].mxu0
  %v267 = vadd.f32 0.0, %v266
  %v268 = vpop.f32.mrb[0].mxu0
  %v269 = vpop.f32.mrb[0].mxu0
  %v270 = vadd.f32 0.0, %v269
  %v271 = vpop.f32.mrb[0].mxu0
  %272 = vmatprep.mubr.bf16.mxu0 0
  %273 = vmatmul.mubr.bf16.gmra.mrb[0].mxu0 %v127
  %v274 = vpop.f32.mrb[0].mxu0
  %v275 = vadd.f32 0.0, %v274
  %v276 = vpop.f32.mrb[0].mxu0
  %v277 = vpop.f32.mrb[0].mxu0
  %v278 = vadd.f32 0.0, %v277
  %v279 = vpop.f32.mrb[0].mxu0
  %280 = vdwg.mxu0
  %v281 = vadd.f32 %v56, %v219
  %v282 = vadd.f32 %v57, %v222
  %v283 = vadd.f32 %v58, %v227
  %v284 = vadd.f32 %v59, %v230
  %v285 = vadd.f32 %v60, %v235
  %v286 = vadd.f32 %v61, %v238
  %v287 = vadd.f32 %v62, %v243
  %v288 = vadd.f32 %v63, %v246
  %v289 = vadd.f32 %v64, %v251
  %v290 = vadd.f32 %v65, %v254
  %v291 = vadd.f32 %v66, %v259
  %v292 = vadd.f32 %v67, %v262
  %v293 = vadd.f32 %v68, %v267
  %v294 = vadd.f32 %v69, %v270
  %v295 = vadd.f32 %v70, %v275
  %v296 = vadd.f32 %v71, %v278
  %297 = vst [vmem:[#allocation2] sm:$0xff] %v281
  %298 = vst [vmem:[#allocation2 + $0x8] sm:$0xff] %v282
  %299 = vst [vmem:[#allocation2 + $0x10] sm:$0xff] %v283
  %300 = vst [vmem:[#allocation2 + $0x18] sm:$0xff] %v284
  %301 = vst [vmem:[#allocation2 + $0x20] sm:$0xff] %v285
  %302 = vst [vmem:[#allocation2 + $0x28] sm:$0xff] %v286
  %303 = vst [vmem:[#allocation2 + $0x30] sm:$0xff] %v287
  %304 = vst [vmem:[#allocation2 + $0x38] sm:$0xff] %v288
  %305 = vst [vmem:[#allocation2 + $0x40] sm:$0xff] %v289
  %306 = vst [vmem:[#allocation2 + $0x48] sm:$0xff] %v290
  %307 = vst [vmem:[#allocation2 + $0x50] sm:$0xff] %v291
  %308 = vst [vmem:[#allocation2 + $0x58] sm:$0xff] %v292
  %309 = vst [vmem:[#allocation2 + $0x60] sm:$0xff] %v293
  %310 = vst [vmem:[#allocation2 + $0x68] sm:$0xff] %v294
  %311 = vst [vmem:[#allocation2 + $0x70] sm:$0xff] %v295
  %312 = vst [vmem:[#allocation2 + $0x78] sm:$0xff] %v296
  // Predicated region
  $region18: #{gcn_forward.5} parent=0 // pred_check
    %p313 = pneg %p15
  $region19: #{gcn_forward.5} parent=0 // pred_check_branch
    %315 = sbr.rel (%p313) target = $region21
  $region20: #{gcn_forward.5} parent=0 // pred_region
    %v316 = vld [vmem:[#allocation2] sm:$0xff]
    %v317 = vld [vmem:[#allocation2 + $0x8] sm:$0xff]
    %v318 = vld [vmem:[#allocation2 + $0x10] sm:$0xff]
    %v319 = vld [vmem:[#allocation2 + $0x18] sm:$0xff]
    %v320 = vld [vmem:[#allocation2 + $0x20] sm:$0xff]
    %v321 = vld [vmem:[#allocation2 + $0x28] sm:$0xff]
    %v322 = vld [vmem:[#allocation2 + $0x30] sm:$0xff]
    %v323 = vld [vmem:[#allocation2 + $0x38] sm:$0xff]
    %v324 = vld [vmem:[#allocation2 + $0x40] sm:$0xff]
    %v325 = vld [vmem:[#allocation2 + $0x48] sm:$0xff]
    %v326 = vld [vmem:[#allocation2 + $0x50] sm:$0xff]
    %v327 = vld [vmem:[#allocation2 + $0x58] sm:$0xff]
    %v328 = vld [vmem:[#allocation2 + $0x60] sm:$0xff]
    %v329 = vld [vmem:[#allocation2 + $0x68] sm:$0xff]
    %v330 = vld [vmem:[#allocation2 + $0x70] sm:$0xff]
    %v331 = vld [vmem:[#allocation2 + $0x78] sm:$0xff]
    %v332 = vld [vmem:[%s2] sm:$0x1]
    %v334 = vlaneseq
    %v335 = vshrl.u32 %v334, 7
    %v336 = vsub.s32 0, %v335
    %v337 = vrot.slane %v332, %v336
    %v339 = vadd.f32 %v316, %v337
    %v340 = vadd.f32 %v317, %v337
    %v341 = vadd.f32 %v318, %v337
    %v342 = vadd.f32 %v319, %v337
    %v343 = vadd.f32 %v320, %v337
    %v344 = vadd.f32 %v321, %v337
    %v345 = vadd.f32 %v322, %v337
    %v346 = vadd.f32 %v323, %v337
    %v347 = vadd.f32 %v324, %v337
    %v348 = vadd.f32 %v325, %v337
    %v349 = vadd.f32 %v326, %v337
    %v350 = vadd.f32 %v327, %v337
    %v351 = vadd.f32 %v328, %v337
    %v352 = vadd.f32 %v329, %v337
    %v353 = vadd.f32 %v330, %v337
    %v354 = vadd.f32 %v331, %v337
    %v355 = vmax.f32 %v339, 0.0
    %v356 = vmax.f32 %v340, 0.0
    %v357 = vmax.f32 %v341, 0.0
    %v358 = vmax.f32 %v342, 0.0
    %v359 = vmax.f32 %v343, 0.0
    %v360 = vmax.f32 %v344, 0.0
    %v361 = vmax.f32 %v345, 0.0
    %v362 = vmax.f32 %v346, 0.0
    %v363 = vmax.f32 %v347, 0.0
    %v364 = vmax.f32 %v348, 0.0
    %v365 = vmax.f32 %v349, 0.0
    %v366 = vmax.f32 %v350, 0.0
    %v367 = vmax.f32 %v351, 0.0
    %v368 = vmax.f32 %v352, 0.0
    %v369 = vmax.f32 %v353, 0.0
    %v370 = vmax.f32 %v354, 0.0
    %v371 = vpack.c.bf16 %v356, %v355
    %v372 = vpack.c.bf16 %v358, %v357
    %v373 = vpack.c.bf16 %v360, %v359
    %v374 = vpack.c.bf16 %v362, %v361
    %v375 = vpack.c.bf16 %v364, %v363
    %v376 = vpack.c.bf16 %v366, %v365
    %v377 = vpack.c.bf16 %v368, %v367
    %v378 = vpack.c.bf16 %v370, %v369
    %v387 = vunpack.c.l.b16 %v371
    %v388 = vunpack.c.h.b16 %v371
    %v389 = vunpack.c.l.b16 %v372
    %v390 = vunpack.c.h.b16 %v372
    %v391 = vunpack.c.l.b16 %v373
    %v392 = vunpack.c.h.b16 %v373
    %v393 = vunpack.c.l.b16 %v374
    %v394 = vunpack.c.h.b16 %v374
    %v395 = vunpack.c.l.b16 %v375
    %v396 = vunpack.c.h.b16 %v375
    %v397 = vunpack.c.l.b16 %v376
    %v398 = vunpack.c.h.b16 %v376
    %v399 = vunpack.c.l.b16 %v377
    %v400 = vunpack.c.h.b16 %v377
    %v401 = vunpack.c.l.b16 %v378
    %v402 = vunpack.c.h.b16 %v378
    %v403 = vpack.c.b16 %v387, %v387
    %v404 = vpack.c.b16 %v388, %v388
    %v405 = vpack.c.b16 %v389, %v389
    %v406 = vpack.c.b16 %v390, %v390
    %v407 = vpack.c.b16 %v391, %v391
    %v408 = vpack.c.b16 %v392, %v392
    %v409 = vpack.c.b16 %v393, %v393
    %v410 = vpack.c.b16 %v394, %v394
    %v411 = vpack.c.b16 %v395, %v395
    %v412 = vpack.c.b16 %v396, %v396
    %v413 = vpack.c.b16 %v397, %v397
    %v414 = vpack.c.b16 %v398, %v398
    %v415 = vpack.c.b16 %v399, %v399
    %v416 = vpack.c.b16 %v400, %v400
    %v417 = vpack.c.b16 %v401, %v401
    %v418 = vpack.c.b16 %v402, %v402
    %435 = vst [vmem:[%s3] sm:$0xf] %v403
    %436 = vst [vmem:[%s3 + $0x4] sm:$0xf] %v404
    %437 = vst [vmem:[%s3 + $0x8] sm:$0xf] %v405
    %438 = vst [vmem:[%s3 + $0xc] sm:$0xf] %v406
    %439 = vst [vmem:[%s3 + $0x10] sm:$0xf] %v407
    %440 = vst [vmem:[%s3 + $0x14] sm:$0xf] %v408
    %441 = vst [vmem:[%s3 + $0x18] sm:$0xf] %v409
    %442 = vst [vmem:[%s3 + $0x1c] sm:$0xf] %v410
    %443 = vst [vmem:[%s3 + $0x20] sm:$0xf] %v411
    %444 = vst [vmem:[%s3 + $0x24] sm:$0xf] %v412
    %445 = vst [vmem:[%s3 + $0x28] sm:$0xf] %v413
    %446 = vst [vmem:[%s3 + $0x2c] sm:$0xf] %v414
    %447 = vst [vmem:[%s3 + $0x30] sm:$0xf] %v415
    %448 = vst [vmem:[%s3 + $0x34] sm:$0xf] %v416
    %449 = vst [vmem:[%s3 + $0x38] sm:$0xf] %v417
    %450 = vst [vmem:[%s3 + $0x3c] sm:$0xf] %v418
  $region21: #{gcn_forward.5} parent=0 // pred_fallthru
    _
  // Predicated region
  $region22: #{gcn_forward.5} parent=0 // pred_check
    _
  $region23: #{gcn_forward.5} parent=0 // pred_check_branch
    %452 = sbr.rel (0) target = $region25
  $region24: #{gcn_forward.5} parent=0 // pred_region
    _
  $region25: #{gcn_forward.5} parent=0 // pred_fallthru
    _
  // Predicated region
  $region26: #{gcn_forward.5} parent=0 // pred_check
    _
  $region27: #{gcn_forward.5} parent=0 // pred_check_branch
    %454 = sbr.rel (0) target = $region29
  $region28: #{gcn_forward.5} parent=0 // pred_region
    _
  $region29: #{gcn_forward.5} parent=0 // pred_fallthru
    _

// kernel: gcn_forward.4
$region0: #{gcn_forward.4}
  #allocation0 [shape = 'u32[]', space=smem, size = 0x4, offset = 0x4, fixed_abs, tag = 'smem constant byte address 0x4 - core index']
  #allocation1 [shape = 'u32[144,128]{1,0:T(1,128)}', space=vmem, size = 0x12000, scoped, tag = 'internal scratch']
  %s0 = inlined_call_operand.vmem [shape: bf16[128,128], index: 0, kind: input, shape index: {}]
  %s1 = inlined_call_operand.vmem [shape: bf16[128,128], index: 1, kind: input, shape index: {}]
  %s2 = inlined_call_operand.vmem [shape: bf16[128,128], index: 2, kind: output, shape index: {}]
  %s3 = sld [smem:[#allocation0]]
  $region18: #{gcn_forward.4} parent=0
    _
  %s5 = ssub.s32 1, %s3
  %s6 = scalar_select 0, %s5, %s3
  // Predicated region
  $region2: #{gcn_forward.4} parent=0 // pred_check
    _
  $region3: #{gcn_forward.4} parent=0 // pred_check_branch
    %8 = sbr.rel (0) target = $region5
  $region4: #{gcn_forward.4} parent=0 // pred_region
    _
  $region5: #{gcn_forward.4} parent=0 // pred_fallthru
    _
  // Predicated region
  $region6: #{gcn_forward.4} parent=0 // pred_check
    _
  $region7: #{gcn_forward.4} parent=0 // pred_check_branch
    %10 = sbr.rel (0) target = $region9
  $region8: #{gcn_forward.4} parent=0 // pred_region
    _
  $region9: #{gcn_forward.4} parent=0 // pred_fallthru
    _
  %v12 = vld [vmem:[%s0] sm:$0xf]
  %v13 = vld [vmem:[%s0 + $0x4] sm:$0xf]
  %v14 = vld [vmem:[%s0 + $0x8] sm:$0xf]
  %v15 = vld [vmem:[%s0 + $0xc] sm:$0xf]
  %v16 = vld [vmem:[%s0 + $0x10] sm:$0xf]
  %v17 = vld [vmem:[%s0 + $0x14] sm:$0xf]
  %v18 = vld [vmem:[%s0 + $0x18] sm:$0xf]
  %v19 = vld [vmem:[%s0 + $0x1c] sm:$0xf]
  %v20 = vld [vmem:[%s0 + $0x20] sm:$0xf]
  %v21 = vld [vmem:[%s0 + $0x24] sm:$0xf]
  %v22 = vld [vmem:[%s0 + $0x28] sm:$0xf]
  %v23 = vld [vmem:[%s0 + $0x2c] sm:$0xf]
  %v24 = vld [vmem:[%s0 + $0x30] sm:$0xf]
  %v25 = vld [vmem:[%s0 + $0x34] sm:$0xf]
  %v26 = vld [vmem:[%s0 + $0x38] sm:$0xf]
  %v27 = vld [vmem:[%s0 + $0x3c] sm:$0xf]
  %v28 = vld [vmem:[%s1] sm:$0xf]
  %v29 = vld [vmem:[%s1 + $0x4] sm:$0xf]
  %v30 = vld [vmem:[%s1 + $0x8] sm:$0xf]
  %v31 = vld [vmem:[%s1 + $0xc] sm:$0xf]
  %v32 = vld [vmem:[%s1 + $0x10] sm:$0xf]
  %v33 = vld [vmem:[%s1 + $0x14] sm:$0xf]
  %v34 = vld [vmem:[%s1 + $0x18] sm:$0xf]
  %v35 = vld [vmem:[%s1 + $0x1c] sm:$0xf]
  %v36 = vld [vmem:[%s1 + $0x20] sm:$0xf]
  %v37 = vld [vmem:[%s1 + $0x24] sm:$0xf]
  %v38 = vld [vmem:[%s1 + $0x28] sm:$0xf]
  %v39 = vld [vmem:[%s1 + $0x2c] sm:$0xf]
  %v40 = vld [vmem:[%s1 + $0x30] sm:$0xf]
  %v41 = vld [vmem:[%s1 + $0x34] sm:$0xf]
  %v42 = vld [vmem:[%s1 + $0x38] sm:$0xf]
  %v43 = vld [vmem:[%s1 + $0x3c] sm:$0xf]
  %v60 = vunpack.c.l.b16 %v12
  %v61 = vunpack.c.l.b16 %v13
  %v62 = vunpack.c.l.b16 %v14
  %v63 = vunpack.c.l.b16 %v15
  %v64 = vunpack.c.l.b16 %v16
  %v65 = vunpack.c.l.b16 %v17
  %v66 = vunpack.c.l.b16 %v18
  %v67 = vunpack.c.l.b16 %v19
  %v68 = vunpack.c.l.b16 %v20
  %v69 = vunpack.c.l.b16 %v21
  %v70 = vunpack.c.l.b16 %v22
  %v71 = vunpack.c.l.b16 %v23
  %v72 = vunpack.c.l.b16 %v24
  %v73 = vunpack.c.l.b16 %v25
  %v74 = vunpack.c.l.b16 %v26
  %v75 = vunpack.c.l.b16 %v27
  %v76 = vpack.c.b16 %v61, %v60
  %v77 = vpack.c.b16 %v63, %v62
  %v78 = vpack.c.b16 %v65, %v64
  %v79 = vpack.c.b16 %v67, %v66
  %v80 = vpack.c.b16 %v69, %v68
  %v81 = vpack.c.b16 %v71, %v70
  %v82 = vpack.c.b16 %v73, %v72
  %v83 = vpack.c.b16 %v75, %v74
  %v108 = vunpack.c.l.b16 %v28
  %v109 = vunpack.c.l.b16 %v29
  %v110 = vunpack.c.l.b16 %v30
  %v111 = vunpack.c.l.b16 %v31
  %v112 = vunpack.c.l.b16 %v32
  %v113 = vunpack.c.l.b16 %v33
  %v114 = vunpack.c.l.b16 %v34
  %v115 = vunpack.c.l.b16 %v35
  %v116 = vunpack.c.l.b16 %v36
  %v117 = vunpack.c.l.b16 %v37
  %v118 = vunpack.c.l.b16 %v38
  %v119 = vunpack.c.l.b16 %v39
  %v120 = vunpack.c.l.b16 %v40
  %v121 = vunpack.c.l.b16 %v41
  %v122 = vunpack.c.l.b16 %v42
  %v123 = vunpack.c.l.b16 %v43
  %v124 = vpack.c.b16 %v109, %v108
  %v125 = vpack.c.b16 %v111, %v110
  %v126 = vpack.c.b16 %v113, %v112
  %v127 = vpack.c.b16 %v115, %v114
  %v128 = vpack.c.b16 %v117, %v116
  %v129 = vpack.c.b16 %v119, %v118
  %v130 = vpack.c.b16 %v121, %v120
  %v131 = vpack.c.b16 %v123, %v122
  %140 = vmatprep.subr.bf16.mxu0 0
  %141 = vmatpush1.bf16.msra.mxu0 %v124
  %142 = vmatprep.subr.bf16.mxu0 0
  %143 = vmatpush1.bf16.msra.mxu0 %v125
  %144 = vmatprep.subr.bf16.mxu0 0
  %145 = vmatpush1.bf16.msra.mxu0 %v126
  %146 = vmatprep.subr.bf16.mxu0 0
  %147 = vmatpush1.bf16.msra.mxu0 %v127
  %148 = vmatprep.subr.bf16.mxu0 0
  %149 = vmatpush1.bf16.msra.mxu0 %v128
  %150 = vmatprep.subr.bf16.mxu0 0
  %151 = vmatpush1.bf16.msra.mxu0 %v129
  %152 = vmatprep.subr.bf16.mxu0 0
  %153 = vmatpush1.bf16.msra.mxu0 %v130
  %154 = vmatprep.subr.bf16.mxu0 0
  %155 = vmatpush1.bf16.msra.mxu0 %v131
  %156 = vmatprep.subr.bf16.mxu0 0
  %157 = vmatpush1.bf16.msra.mxu0 0
  %158 = vmatprep.subr.bf16.mxu0 0
  %159 = vmatpush1.bf16.msra.mxu0 0
  %160 = vmatprep.subr.bf16.mxu0 0
  %161 = vmatpush1.bf16.msra.mxu0 0
  %162 = vmatprep.subr.bf16.mxu0 0
  %163 = vmatpush1.bf16.msra.mxu0 0
  %164 = vmatprep.subr.bf16.mxu0 0
  %165 = vmatpush1.bf16.msra.mxu0 0
  %166 = vmatprep.subr.bf16.mxu0 0
  %167 = vmatpush1.bf16.msra.mxu0 0
  %168 = vmatprep.subr.bf16.mxu0 0
  %169 = vmatpush1.bf16.msra.mxu0 0
  %170 = vmatprep.subr.bf16.mxu0 0
  %171 = vmatpush1.bf16.msra.mxu0 0
  %172 = vmatprep.mubr.bf16.mxu0 0
  %173 = vmatmul.mubr.bf16.gmra.mrb[0].mxu0 %v76
  %v174 = vpop.f32.mrb[0].mxu0
  %v175 = vadd.f32 0.0, %v174
  %v176 = vpop.f32.mrb[0].mxu0
  %v177 = vpop.f32.mrb[0].mxu0
  %v178 = vadd.f32 0.0, %v177
  %v179 = vpop.f32.mrb[0].mxu0
  %180 = vmatprep.mubr.bf16.mxu0 0
  %181 = vmatmul.mubr.bf16.gmra.mrb[0].mxu0 %v77
  %v182 = vpop.f32.mrb[0].mxu0
  %v183 = vadd.f32 0.0, %v182
  %v184 = vpop.f32.mrb[0].mxu0
  %v185 = vpop.f32.mrb[0].mxu0
  %v186 = vadd.f32 0.0, %v185
  %v187 = vpop.f32.mrb[0].mxu0
  %188 = vmatprep.mubr.bf16.mxu0 0
  %189 = vmatmul.mubr.bf16.gmra.mrb[0].mxu0 %v78
  %v190 = vpop.f32.mrb[0].mxu0
  %v191 = vadd.f32 0.0, %v190
  %v192 = vpop.f32.mrb[0].mxu0
  %v193 = vpop.f32.mrb[0].mxu0
  %v194 = vadd.f32 0.0, %v193
  %v195 = vpop.f32.mrb[0].mxu0
  %196 = vmatprep.mubr.bf16.mxu0 0
  %197 = vmatmul.mubr.bf16.gmra.mrb[0].mxu0 %v79
  %v198 = vpop.f32.mrb[0].mxu0
  %v199 = vadd.f32 0.0, %v198
  %v200 = vpop.f32.mrb[0].mxu0
  %v201 = vpop.f32.mrb[0].mxu0
  %v202 = vadd.f32 0.0, %v201
  %v203 = vpop.f32.mrb[0].mxu0
  %204 = vmatprep.mubr.bf16.mxu0 0
  %205 = vmatmul.mubr.bf16.gmra.mrb[0].mxu0 %v80
  %v206 = vpop.f32.mrb[0].mxu0
  %v207 = vadd.f32 0.0, %v206
  %v208 = vpop.f32.mrb[0].mxu0
  %v209 = vpop.f32.mrb[0].mxu0
  %v210 = vadd.f32 0.0, %v209
  %v211 = vpop.f32.mrb[0].mxu0
  %212 = vmatprep.mubr.bf16.mxu0 0
  %213 = vmatmul.mubr.bf16.gmra.mrb[0].mxu0 %v81
  %v214 = vpop.f32.mrb[0].mxu0
  %v215 = vadd.f32 0.0, %v214
  %v216 = vpop.f32.mrb[0].mxu0
  %v217 = vpop.f32.mrb[0].mxu0
  %v218 = vadd.f32 0.0, %v217
  %v219 = vpop.f32.mrb[0].mxu0
  %220 = vmatprep.mubr.bf16.mxu0 0
  %221 = vmatmul.mubr.bf16.gmra.mrb[0].mxu0 %v82
  %v222 = vpop.f32.mrb[0].mxu0
  %v223 = vadd.f32 0.0, %v222
  %v224 = vpop.f32.mrb[0].mxu0
  %v225 = vpop.f32.mrb[0].mxu0
  %v226 = vadd.f32 0.0, %v225
  %v227 = vpop.f32.mrb[0].mxu0
  %228 = vmatprep.mubr.bf16.mxu0 0
  %229 = vmatmul.mubr.bf16.gmra.mrb[0].mxu0 %v83
  %v230 = vpop.f32.mrb[0].mxu0
  %v231 = vadd.f32 0.0, %v230
  %v232 = vpop.f32.mrb[0].mxu0
  %v233 = vpop.f32.mrb[0].mxu0
  %v234 = vadd.f32 0.0, %v233
  %v235 = vpop.f32.mrb[0].mxu0
  %236 = vdwg.mxu0
  %v237 = vpack.c.bf16 %v178, %v175
  %v238 = vpack.c.bf16 %v186, %v183
  %v239 = vpack.c.bf16 %v194, %v191
  %v240 = vpack.c.bf16 %v202, %v199
  %v241 = vpack.c.bf16 %v210, %v207
  %v242 = vpack.c.bf16 %v218, %v215
  %v243 = vpack.c.bf16 %v226, %v223
  %v244 = vpack.c.bf16 %v234, %v231
  %v253 = vunpack.c.l.b16 %v237
  %v254 = vunpack.c.h.b16 %v237
  %v255 = vunpack.c.l.b16 %v238
  %v256 = vunpack.c.h.b16 %v238
  %v257 = vunpack.c.l.b16 %v239
  %v258 = vunpack.c.h.b16 %v239
  %v259 = vunpack.c.l.b16 %v240
  %v260 = vunpack.c.h.b16 %v240
  %v261 = vunpack.c.l.b16 %v241
  %v262 = vunpack.c.h.b16 %v241
  %v263 = vunpack.c.l.b16 %v242
  %v264 = vunpack.c.h.b16 %v242
  %v265 = vunpack.c.l.b16 %v243
  %v266 = vunpack.c.h.b16 %v243
  %v267 = vunpack.c.l.b16 %v244
  %v268 = vunpack.c.h.b16 %v244
  %v269 = vpack.c.b16 %v253, %v253
  %v270 = vpack.c.b16 %v254, %v254
  %v271 = vpack.c.b16 %v255, %v255
  %v272 = vpack.c.b16 %v256, %v256
  %v273 = vpack.c.b16 %v257, %v257
  %v274 = vpack.c.b16 %v258, %v258
  %v275 = vpack.c.b16 %v259, %v259
  %v276 = vpack.c.b16 %v260, %v260
  %v277 = vpack.c.b16 %v261, %v261
  %v278 = vpack.c.b16 %v262, %v262
  %v279 = vpack.c.b16 %v263, %v263
  %v280 = vpack.c.b16 %v264, %v264
  %v281 = vpack.c.b16 %v265, %v265
  %v282 = vpack.c.b16 %v266, %v266
  %v283 = vpack.c.b16 %v267, %v267
  %v284 = vpack.c.b16 %v268, %v268
  %301 = vst [vmem:[%s2] sm:$0xf] %v269
  %302 = vst [vmem:[%s2 + $0x4] sm:$0xf] %v270
  %303 = vst [vmem:[%s2 + $0x8] sm:$0xf] %v271
  %304 = vst [vmem:[%s2 + $0xc] sm:$0xf] %v272
  %305 = vst [vmem:[%s2 + $0x10] sm:$0xf] %v273
  %306 = vst [vmem:[%s2 + $0x14] sm:$0xf] %v274
  %307 = vst [vmem:[%s2 + $0x18] sm:$0xf] %v275
  %308 = vst [vmem:[%s2 + $0x1c] sm:$0xf] %v276
  %309 = vst [vmem:[%s2 + $0x20] sm:$0xf] %v277
  %310 = vst [vmem:[%s2 + $0x24] sm:$0xf] %v278
  %311 = vst [vmem:[%s2 + $0x28] sm:$0xf] %v279
  %312 = vst [vmem:[%s2 + $0x2c] sm:$0xf] %v280
  %313 = vst [vmem:[%s2 + $0x30] sm:$0xf] %v281
  %314 = vst [vmem:[%s2 + $0x34] sm:$0xf] %v282
  %315 = vst [vmem:[%s2 + $0x38] sm:$0xf] %v283
  %316 = vst [vmem:[%s2 + $0x3c] sm:$0xf] %v284
  // Predicated region
  $region10: #{gcn_forward.4} parent=0 // pred_check
    _
  $region11: #{gcn_forward.4} parent=0 // pred_check_branch
    %318 = sbr.rel (0) target = $region13
  $region12: #{gcn_forward.4} parent=0 // pred_region
    _
  $region13: #{gcn_forward.4} parent=0 // pred_fallthru
    _
  // Predicated region
  $region14: #{gcn_forward.4} parent=0 // pred_check
    _
  $region15: #{gcn_forward.4} parent=0 // pred_check_branch
    %320 = sbr.rel (0) target = $region17
  $region16: #{gcn_forward.4} parent=0 // pred_region
    _
  $region17: #{gcn_forward.4} parent=0 // pred_fallthru
    _

</llo_original>
